<compile_context>
chip_gen: v6e
topology: v6e:2x2x1
jax: 0.10.0
libtpu: 0.0.40
codegen_flags: <defaults>
</compile_context>

<pallas_src>
import math

import jax
import jax.numpy as jnp
from jax.experimental import pallas as pl
from jax.experimental.pallas import tpu as pltpu

# -------- static configuration (small, consistent with the module) ----------
BATCH = 2
SEQ = 8
HID_DIM = 32
N_HEADS = 4
HEAD_DIM = HID_DIM // N_HEADS
SCALE = math.sqrt(float(HEAD_DIM))


# ----------------------------- Pallas kernel --------------------------------
def mha_kernel(q_ref, k_ref, v_ref, wq_ref, bq_ref, wk_ref, bk_ref,
               wvo_ref, bout_ref, out_ref, attn_ref):
    """Single grid-less invocation — whole (tiny) batch at once.

    q_ref/k_ref/v_ref : (B*S, H)        flattened query / key / value
    wq_ref            : (H, H)          wq.T * (1/sqrt(head_dim))
    bq_ref            : (1, H)          bq   * (1/sqrt(head_dim))
    wk_ref, bk_ref    : (H, H), (1, H)  wk.T, bk
    wvo_ref           : (H, N_HEADS*H)  per-head fused  wv_h.T @ wo_h.T
    bout_ref          : (1, H)          bv @ wo.T + bo
    out_ref           : (B, S, H)
    attn_ref          : (B*S, N_HEADS*S)  rows=(b,q), cols=(head, key)
    """
    # Projections (scale already folded into wq/bq; Wo fused into the V path).
    q = (jnp.dot(q_ref[...], wq_ref[...], preferred_element_type=jnp.float32)
         + bq_ref[...]).reshape(BATCH, SEQ, HID_DIM)
    k = (jnp.dot(k_ref[...], wk_ref[...], preferred_element_type=jnp.float32)
         + bk_ref[...]).reshape(BATCH, SEQ, HID_DIM)
    # V projection fused with the per-head output projection: lane width 128.
    vp = jnp.dot(v_ref[...], wvo_ref[...],
                 preferred_element_type=jnp.float32
                 ).reshape(BATCH, SEQ, N_HEADS * HID_DIM)

    acc = jnp.zeros((BATCH, SEQ, HID_DIM), jnp.float32)
    attn_cols = []

    # Static 4-iteration head loop; each iteration batched over batch with
    # single-batch-dim einsums. No concatenate of heads on the context path
    # and no per-head epilogue dot: each head contributes a full-width
    # (B, S, H) slab that is summed directly.
    for h in range(N_HEADS):
        lo = h * HEAD_DIM
        q_h = q[:, :, lo:lo + HEAD_DIM]                       # (B, S, D)
        k_h = k[:, :, lo:lo + HEAD_DIM]                       # (B, S, D)
        vp_h = vp[:, :, h * HID_DIM:(h + 1) * HID_DIM]        # (B, S, H)

        energy = jnp.einsum('bqd,bkd->bqk', q_h, k_h,
                            preferred_element_type=jnp.float32)   # (B, S, S)
        m = jnp.max(energy, axis=-1, keepdims=True)
        e = jnp.exp(energy - m)
        attn = e / jnp.sum(e, axis=-1, keepdims=True)         # exact softmax
        attn_cols.append(attn.reshape(BATCH * SEQ, SEQ))      # leading-dim merge

        # out contribution of this head: attn @ (V @ Wvo_h)  -> (B, S, H)
        acc = acc + jnp.einsum('bqk,bkh->bqh', attn, vp_h,
                               preferred_element_type=jnp.float32)

    # One lane-dense (B*S, nh*S) store instead of per-head 8-lane masked stores.
    attn_ref[...] = jnp.concatenate(attn_cols, axis=-1)
    out_ref[...] = acc + bout_ref[...]


# ----------------------- one-time weight preparation -------------------------
def prepare_params(params):
    """Hoisted, once-at-init weight fusion (NOT part of the per-call path)."""
    wq, bq, wk, bk, wv, bv, wo, bo = params
    inv_scale = 1.0 / SCALE
    hp = jax.lax.Precision.HIGHEST

    wq_t = wq.T * inv_scale            # fold 1/sqrt(head_dim) into Q projection
    bq_s = bq * inv_scale
    wk_t = wk.T
    wv_t, wo_t = wv.T, wo.T

    # Per-head fused V*O weight: (H, D) @ (D, H) -> (H, H); concat over heads
    # along the output (lane) dim -> (H, n_heads*H) = (32, 128).
    wvo = jnp.concatenate(
        [jnp.matmul(wv_t[:, h * HEAD_DIM:(h + 1) * HEAD_DIM],
                    wo_t[h * HEAD_DIM:(h + 1) * HEAD_DIM, :], precision=hp)
         for h in range(N_HEADS)], axis=1)

    # bv folds through the attention matrix (softmax rows sum to 1):
    # sum_h bv_h @ wo_h.T = bv @ wo.T
    b_out = jnp.matmul(bv, wo_t, precision=hp) + bo
    return (wq_t, bq_s, wk_t, bk, wvo, b_out)


# ------------------------------ wrapper --------------------------------------
@jax.jit
def mha_forward(query, key, value, prepared):
    """Eval-mode forward (dropout = identity, mask = None)."""
    wq_t, bq_s, wk_t, bk, wvo, b_out = prepared
    B, Sq, H = query.shape
    Sk = key.shape[1]

    # Per-call plumbing is only free leading-dim reshapes.
    q2 = query.reshape(B * Sq, H)
    k2 = key.reshape(B * Sk, H)
    v2 = value.reshape(B * Sk, H)

    vmem = pl.BlockSpec(memory_space=pltpu.MemorySpace.VMEM)
    out, attn_flat = pl.pallas_call(
        mha_kernel,
        out_shape=(
            jax.ShapeDtypeStruct((B, Sq, H), jnp.float32),
            jax.ShapeDtypeStruct((B * Sq, N_HEADS * Sk), jnp.float32),
        ),
        in_specs=[vmem] * 9,
        out_specs=(vmem, vmem),
    )(q2, k2, v2, wq_t, bq_s, wk_t, bk, wvo, b_out)

    # rows=(b,q), cols=(h,k)  ->  (B, nh, Sq, Sk)
    attn = attn_flat.reshape(B, Sq, N_HEADS, Sk).transpose(0, 2, 1, 3)
    return out, attn


# --------------------------- pure-JAX reference ------------------------------
def mha_reference(query, key, value, params):
    wq, bq, wk, bk, wv, bv, wo, bo = params
    B, S, H = query.shape
    Q = query @ wq.T + bq[0]
    K = key @ wk.T + bk[0]
    V = value @ wv.T + bv[0]
    Q = Q.reshape(B, S, N_HEADS, HEAD_DIM).transpose(0, 2, 1, 3)   # b h q d
    Kt = K.reshape(B, S, N_HEADS, HEAD_DIM).transpose(0, 2, 3, 1)  # b h d k
    V = V.reshape(B, S, N_HEADS, HEAD_DIM).transpose(0, 2, 1, 3)   # b h k d
    energy = jnp.matmul(Q, Kt) / SCALE
    attention = jax.nn.softmax(energy, axis=-1)
    x = jnp.matmul(attention, V)                                    # b h q d
    x = x.transpose(0, 2, 1, 3).reshape(B, S, H)
    x = x @ wo.T + bo[0]
    return x, attention


# ------------------------------- main ----------------------------------------
if __name__ == "__main__":
    key0 = jax.random.PRNGKey(0)
    keys = jax.random.split(key0, 12)

    def init_linear(kw, kb):
        # deterministic init mimicking nn.Linear's uniform(-1/sqrt(H), 1/sqrt(H))
        bound = 1.0 / math.sqrt(HID_DIM)
        w = jax.random.uniform(kw, (HID_DIM, HID_DIM), jnp.float32, -bound, bound)
        b = jax.random.uniform(kb, (1, HID_DIM), jnp.float32, -bound, bound)
        return w, b

    wq, bq = init_linear(keys[0], keys[1])
    wk, bk = init_linear(keys[2], keys[3])
    wv, bv = init_linear(keys[4], keys[5])
    wo, bo = init_linear(keys[6], keys[7])
    params = (wq, bq, wk, bk, wv, bv, wo, bo)

    # One-time weight fusion, hoisted out of the per-call path.
    prepared = prepare_params(params)

    query = jax.random.normal(keys[8], (BATCH, SEQ, HID_DIM), jnp.float32)
    key_in = jax.random.normal(keys[9], (BATCH, SEQ, HID_DIM), jnp.float32)
    value = jax.random.normal(keys[10], (BATCH, SEQ, HID_DIM), jnp.float32)

    out, attn = mha_forward(query, key_in, value, prepared)
    out = jax.block_until_ready(out)
    attn = jax.block_until_ready(attn)

    out_ref, attn_ref = mha_reference(query, key_in, value, params)
    assert out.shape == (BATCH, SEQ, HID_DIM)
    assert attn.shape == (BATCH, N_HEADS, SEQ, SEQ)
    # Exact softmax restored (approx reciprocal removed); remaining diffs are
    # only f32 matmul reassociation from the Wo-into-V fold -> tolerance 1e-4
    # (was 2e-3 in the previous version).
    assert jnp.allclose(out, out_ref, atol=1e-4, rtol=1e-4), \
        float(jnp.max(jnp.abs(out - out_ref)))
    assert jnp.allclose(attn, attn_ref, atol=1e-4, rtol=1e-4), \
        float(jnp.max(jnp.abs(attn - attn_ref)))

    print("KERNEL_OK")
</pallas_src>

<mosaic_0001>
module attributes {stable_mosaic.version = 11 : i64} {
  func.func @mha_kernel(%arg0: memref<16x32xf32, #tpu.memory_space<vmem>>, %arg1: memref<16x32xf32, #tpu.memory_space<vmem>>, %arg2: memref<16x32xf32, #tpu.memory_space<vmem>>, %arg3: memref<32x32xf32, #tpu.memory_space<vmem>>, %arg4: memref<1x32xf32, #tpu.memory_space<vmem>>, %arg5: memref<32x32xf32, #tpu.memory_space<vmem>>, %arg6: memref<1x32xf32, #tpu.memory_space<vmem>>, %arg7: memref<32x128xf32, #tpu.memory_space<vmem>>, %arg8: memref<1x32xf32, #tpu.memory_space<vmem>>, %arg9: memref<2x8x32xf32, #tpu.memory_space<vmem>>, %arg10: memref<16x32xf32, #tpu.memory_space<vmem>>) attributes {dimension_semantics = [], scalar_prefetch = 0 : i64, scratch_operands = 0 : i64, tpu.core_type = #tpu.core_type<tc>} {
    %c0 = arith.constant 0 : index
    %c0_0 = arith.constant 0 : index
    %0 = vector.load %arg0[%c0, %c0_0] : memref<16x32xf32, #tpu.memory_space<vmem>>, vector<16x32xf32>
    %c0_1 = arith.constant 0 : index
    %c0_2 = arith.constant 0 : index
    %1 = vector.load %arg3[%c0_1, %c0_2] : memref<32x32xf32, #tpu.memory_space<vmem>>, vector<32x32xf32>
    %cst = arith.constant dense<0.000000e+00> : vector<16x32xf32>
    %2 = tpu.matmul %0, %1, %cst {dimension_numbers = #tpu.dot_dimension_numbers<[1], [0], [0], [1], [0, 0, 1, 1], [], []>} : vector<16x32xf32>, vector<32x32xf32>, vector<16x32xf32> -> vector<16x32xf32>
    %c0_3 = arith.constant 0 : index
    %c0_4 = arith.constant 0 : index
    %3 = vector.load %arg4[%c0_3, %c0_4] : memref<1x32xf32, #tpu.memory_space<vmem>>, vector<1x32xf32>
    %4 = vector.broadcast %3 : vector<1x32xf32> to vector<16x32xf32>
    %5 = arith.addf %2, %4 : vector<16x32xf32>
    %6 = vector.shape_cast %5 : vector<16x32xf32> to vector<2x8x32xf32>
    %c0_5 = arith.constant 0 : index
    %c0_6 = arith.constant 0 : index
    %7 = vector.load %arg1[%c0_5, %c0_6] : memref<16x32xf32, #tpu.memory_space<vmem>>, vector<16x32xf32>
    %c0_7 = arith.constant 0 : index
    %c0_8 = arith.constant 0 : index
    %8 = vector.load %arg5[%c0_7, %c0_8] : memref<32x32xf32, #tpu.memory_space<vmem>>, vector<32x32xf32>
    %cst_9 = arith.constant dense<0.000000e+00> : vector<16x32xf32>
    %9 = tpu.matmul %7, %8, %cst_9 {dimension_numbers = #tpu.dot_dimension_numbers<[1], [0], [0], [1], [0, 0, 1, 1], [], []>} : vector<16x32xf32>, vector<32x32xf32>, vector<16x32xf32> -> vector<16x32xf32>
    %c0_10 = arith.constant 0 : index
    %c0_11 = arith.constant 0 : index
    %10 = vector.load %arg6[%c0_10, %c0_11] : memref<1x32xf32, #tpu.memory_space<vmem>>, vector<1x32xf32>
    %11 = vector.broadcast %10 : vector<1x32xf32> to vector<16x32xf32>
    %12 = arith.addf %9, %11 : vector<16x32xf32>
    %13 = vector.shape_cast %12 : vector<16x32xf32> to vector<2x8x32xf32>
    %c0_12 = arith.constant 0 : index
    %c0_13 = arith.constant 0 : index
    %14 = vector.load %arg2[%c0_12, %c0_13] : memref<16x32xf32, #tpu.memory_space<vmem>>, vector<16x32xf32>
    %c0_14 = arith.constant 0 : index
    %c0_15 = arith.constant 0 : index
    %15 = vector.load %arg7[%c0_14, %c0_15] : memref<32x128xf32, #tpu.memory_space<vmem>>, vector<32x128xf32>
    %cst_16 = arith.constant dense<0.000000e+00> : vector<16x128xf32>
    %16 = tpu.matmul %14, %15, %cst_16 {dimension_numbers = #tpu.dot_dimension_numbers<[1], [0], [0], [1], [0, 0, 1, 1], [], []>} : vector<16x32xf32>, vector<32x128xf32>, vector<16x128xf32> -> vector<16x128xf32>
    %17 = vector.shape_cast %16 : vector<16x128xf32> to vector<2x8x128xf32>
    %cst_17 = arith.constant 0.000000e+00 : f32
    %18 = vector.broadcast %cst_17 : f32 to vector<2x8x32xf32>
    %19 = vector.extract_strided_slice %6 {offsets = [0, 0, 0], sizes = [2, 8, 8], strides = [1, 1, 1]} : vector<2x8x32xf32> to vector<2x8x8xf32>
    %20 = vector.extract_strided_slice %13 {offsets = [0, 0, 0], sizes = [2, 8, 8], strides = [1, 1, 1]} : vector<2x8x32xf32> to vector<2x8x8xf32>
    %21 = vector.extract_strided_slice %17 {offsets = [0, 0, 0], sizes = [2, 8, 32], strides = [1, 1, 1]} : vector<2x8x128xf32> to vector<2x8x32xf32>
    "tpu.trace_start"() <{level = 10 : i32, message = "bqd,bkd->bqk"}> : () -> ()
    %cst_18 = arith.constant dense<0.000000e+00> : vector<2x8x8xf32>
    %22 = tpu.matmul %19, %20, %cst_18 {dimension_numbers = #tpu.dot_dimension_numbers<[2], [2], [1], [1], [0, 0, 0, 1, 1, 1], [0], [0]>} : vector<2x8x8xf32>, vector<2x8x8xf32>, vector<2x8x8xf32> -> vector<2x8x8xf32>
    "tpu.trace_stop"() : () -> ()
    %cst_19 = arith.constant dense<0xFF800000> : vector<2x8xf32>
    %23 = vector.multi_reduction <maximumf>, %22, %cst_19 [2] : vector<2x8x8xf32> to vector<2x8xf32>
    %24 = vector.shape_cast %23 : vector<2x8xf32> to vector<2x8x1xf32>
    %25 = vector.broadcast %24 : vector<2x8x1xf32> to vector<2x8x8xf32>
    %26 = arith.subf %22, %25 : vector<2x8x8xf32>
    %27 = math.exp %26 : vector<2x8x8xf32>
    %cst_20 = arith.constant dense<0.000000e+00> : vector<2x8xf32>
    %28 = vector.multi_reduction <add>, %27, %cst_20 [2] : vector<2x8x8xf32> to vector<2x8xf32>
    %29 = vector.shape_cast %28 : vector<2x8xf32> to vector<2x8x1xf32>
    %30 = vector.broadcast %29 : vector<2x8x1xf32> to vector<2x8x8xf32>
    %31 = arith.divf %27, %30 : vector<2x8x8xf32>
    %32 = vector.shape_cast %31 : vector<2x8x8xf32> to vector<16x8xf32>
    "tpu.trace_start"() <{level = 10 : i32, message = "bqk,bkh->bqh"}> : () -> ()
    %cst_21 = arith.constant dense<0.000000e+00> : vector<2x8x32xf32>
    %33 = tpu.matmul %31, %21, %cst_21 {dimension_numbers = #tpu.dot_dimension_numbers<[2], [1], [1], [2], [0, 0, 0, 1, 1, 2], [0], [0]>} : vector<2x8x8xf32>, vector<2x8x32xf32>, vector<2x8x32xf32> -> vector<2x8x32xf32>
    "tpu.trace_stop"() : () -> ()
    %34 = arith.addf %18, %33 : vector<2x8x32xf32>
    %35 = vector.extract_strided_slice %6 {offsets = [0, 0, 8], sizes = [2, 8, 8], strides = [1, 1, 1]} : vector<2x8x32xf32> to vector<2x8x8xf32>
    %36 = vector.extract_strided_slice %13 {offsets = [0, 0, 8], sizes = [2, 8, 8], strides = [1, 1, 1]} : vector<2x8x32xf32> to vector<2x8x8xf32>
    %37 = vector.extract_strided_slice %17 {offsets = [0, 0, 32], sizes = [2, 8, 32], strides = [1, 1, 1]} : vector<2x8x128xf32> to vector<2x8x32xf32>
    "tpu.trace_start"() <{level = 10 : i32, message = "bqd,bkd->bqk"}> : () -> ()
    %cst_22 = arith.constant dense<0.000000e+00> : vector<2x8x8xf32>
    %38 = tpu.matmul %35, %36, %cst_22 {dimension_numbers = #tpu.dot_dimension_numbers<[2], [2], [1], [1], [0, 0, 0, 1, 1, 1], [0], [0]>} : vector<2x8x8xf32>, vector<2x8x8xf32>, vector<2x8x8xf32> -> vector<2x8x8xf32>
    "tpu.trace_stop"() : () -> ()
    %cst_23 = arith.constant dense<0xFF800000> : vector<2x8xf32>
    %39 = vector.multi_reduction <maximumf>, %38, %cst_23 [2] : vector<2x8x8xf32> to vector<2x8xf32>
    %40 = vector.shape_cast %39 : vector<2x8xf32> to vector<2x8x1xf32>
    %41 = vector.broadcast %40 : vector<2x8x1xf32> to vector<2x8x8xf32>
    %42 = arith.subf %38, %41 : vector<2x8x8xf32>
    %43 = math.exp %42 : vector<2x8x8xf32>
    %cst_24 = arith.constant dense<0.000000e+00> : vector<2x8xf32>
    %44 = vector.multi_reduction <add>, %43, %cst_24 [2] : vector<2x8x8xf32> to vector<2x8xf32>
    %45 = vector.shape_cast %44 : vector<2x8xf32> to vector<2x8x1xf32>
    %46 = vector.broadcast %45 : vector<2x8x1xf32> to vector<2x8x8xf32>
    %47 = arith.divf %43, %46 : vector<2x8x8xf32>
    %48 = vector.shape_cast %47 : vector<2x8x8xf32> to vector<16x8xf32>
    "tpu.trace_start"() <{level = 10 : i32, message = "bqk,bkh->bqh"}> : () -> ()
    %cst_25 = arith.constant dense<0.000000e+00> : vector<2x8x32xf32>
    %49 = tpu.matmul %47, %37, %cst_25 {dimension_numbers = #tpu.dot_dimension_numbers<[2], [1], [1], [2], [0, 0, 0, 1, 1, 2], [0], [0]>} : vector<2x8x8xf32>, vector<2x8x32xf32>, vector<2x8x32xf32> -> vector<2x8x32xf32>
    "tpu.trace_stop"() : () -> ()
    %50 = arith.addf %34, %49 : vector<2x8x32xf32>
    %51 = vector.extract_strided_slice %6 {offsets = [0, 0, 16], sizes = [2, 8, 8], strides = [1, 1, 1]} : vector<2x8x32xf32> to vector<2x8x8xf32>
    %52 = vector.extract_strided_slice %13 {offsets = [0, 0, 16], sizes = [2, 8, 8], strides = [1, 1, 1]} : vector<2x8x32xf32> to vector<2x8x8xf32>
    %53 = vector.extract_strided_slice %17 {offsets = [0, 0, 64], sizes = [2, 8, 32], strides = [1, 1, 1]} : vector<2x8x128xf32> to vector<2x8x32xf32>
    "tpu.trace_start"() <{level = 10 : i32, message = "bqd,bkd->bqk"}> : () -> ()
    %cst_26 = arith.constant dense<0.000000e+00> : vector<2x8x8xf32>
    %54 = tpu.matmul %51, %52, %cst_26 {dimension_numbers = #tpu.dot_dimension_numbers<[2], [2], [1], [1], [0, 0, 0, 1, 1, 1], [0], [0]>} : vector<2x8x8xf32>, vector<2x8x8xf32>, vector<2x8x8xf32> -> vector<2x8x8xf32>
    "tpu.trace_stop"() : () -> ()
    %cst_27 = arith.constant dense<0xFF800000> : vector<2x8xf32>
    %55 = vector.multi_reduction <maximumf>, %54, %cst_27 [2] : vector<2x8x8xf32> to vector<2x8xf32>
    %56 = vector.shape_cast %55 : vector<2x8xf32> to vector<2x8x1xf32>
    %57 = vector.broadcast %56 : vector<2x8x1xf32> to vector<2x8x8xf32>
    %58 = arith.subf %54, %57 : vector<2x8x8xf32>
    %59 = math.exp %58 : vector<2x8x8xf32>
    %cst_28 = arith.constant dense<0.000000e+00> : vector<2x8xf32>
    %60 = vector.multi_reduction <add>, %59, %cst_28 [2] : vector<2x8x8xf32> to vector<2x8xf32>
    %61 = vector.shape_cast %60 : vector<2x8xf32> to vector<2x8x1xf32>
    %62 = vector.broadcast %61 : vector<2x8x1xf32> to vector<2x8x8xf32>
    %63 = arith.divf %59, %62 : vector<2x8x8xf32>
    %64 = vector.shape_cast %63 : vector<2x8x8xf32> to vector<16x8xf32>
    "tpu.trace_start"() <{level = 10 : i32, message = "bqk,bkh->bqh"}> : () -> ()
    %cst_29 = arith.constant dense<0.000000e+00> : vector<2x8x32xf32>
    %65 = tpu.matmul %63, %53, %cst_29 {dimension_numbers = #tpu.dot_dimension_numbers<[2], [1], [1], [2], [0, 0, 0, 1, 1, 2], [0], [0]>} : vector<2x8x8xf32>, vector<2x8x32xf32>, vector<2x8x32xf32> -> vector<2x8x32xf32>
    "tpu.trace_stop"() : () -> ()
    %66 = arith.addf %50, %65 : vector<2x8x32xf32>
    %67 = vector.extract_strided_slice %6 {offsets = [0, 0, 24], sizes = [2, 8, 8], strides = [1, 1, 1]} : vector<2x8x32xf32> to vector<2x8x8xf32>
    %68 = vector.extract_strided_slice %13 {offsets = [0, 0, 24], sizes = [2, 8, 8], strides = [1, 1, 1]} : vector<2x8x32xf32> to vector<2x8x8xf32>
    %69 = vector.extract_strided_slice %17 {offsets = [0, 0, 96], sizes = [2, 8, 32], strides = [1, 1, 1]} : vector<2x8x128xf32> to vector<2x8x32xf32>
    "tpu.trace_start"() <{level = 10 : i32, message = "bqd,bkd->bqk"}> : () -> ()
    %cst_30 = arith.constant dense<0.000000e+00> : vector<2x8x8xf32>
    %70 = tpu.matmul %67, %68, %cst_30 {dimension_numbers = #tpu.dot_dimension_numbers<[2], [2], [1], [1], [0, 0, 0, 1, 1, 1], [0], [0]>} : vector<2x8x8xf32>, vector<2x8x8xf32>, vector<2x8x8xf32> -> vector<2x8x8xf32>
    "tpu.trace_stop"() : () -> ()
    %cst_31 = arith.constant dense<0xFF800000> : vector<2x8xf32>
    %71 = vector.multi_reduction <maximumf>, %70, %cst_31 [2] : vector<2x8x8xf32> to vector<2x8xf32>
    %72 = vector.shape_cast %71 : vector<2x8xf32> to vector<2x8x1xf32>
    %73 = vector.broadcast %72 : vector<2x8x1xf32> to vector<2x8x8xf32>
    %74 = arith.subf %70, %73 : vector<2x8x8xf32>
    %75 = math.exp %74 : vector<2x8x8xf32>
    %cst_32 = arith.constant dense<0.000000e+00> : vector<2x8xf32>
    %76 = vector.multi_reduction <add>, %75, %cst_32 [2] : vector<2x8x8xf32> to vector<2x8xf32>
    %77 = vector.shape_cast %76 : vector<2x8xf32> to vector<2x8x1xf32>
    %78 = vector.broadcast %77 : vector<2x8x1xf32> to vector<2x8x8xf32>
    %79 = arith.divf %75, %78 : vector<2x8x8xf32>
    %80 = vector.shape_cast %79 : vector<2x8x8xf32> to vector<16x8xf32>
    "tpu.trace_start"() <{level = 10 : i32, message = "bqk,bkh->bqh"}> : () -> ()
    %cst_33 = arith.constant dense<0.000000e+00> : vector<2x8x32xf32>
    %81 = tpu.matmul %79, %69, %cst_33 {dimension_numbers = #tpu.dot_dimension_numbers<[2], [1], [1], [2], [0, 0, 0, 1, 1, 2], [0], [0]>} : vector<2x8x8xf32>, vector<2x8x32xf32>, vector<2x8x32xf32> -> vector<2x8x32xf32>
    "tpu.trace_stop"() : () -> ()
    %82 = arith.addf %66, %81 : vector<2x8x32xf32>
    %83 = tpu.concatenate %32, %48, %64, %80 in 1 : vector<16x8xf32>, vector<16x8xf32>, vector<16x8xf32>, vector<16x8xf32> -> vector<16x32xf32>
    %c0_34 = arith.constant 0 : index
    %c0_35 = arith.constant 0 : index
    %84 = vector.load %arg10[%c0_34, %c0_35] : memref<16x32xf32, #tpu.memory_space<vmem>>, vector<16x32xf32>
    tpu.vector_store %arg10[%c0_34, %c0_35], %83 {strides = array<i32>} : memref<16x32xf32, #tpu.memory_space<vmem>>, vector<16x32xf32>,
    %c0_36 = arith.constant 0 : index
    %c0_37 = arith.constant 0 : index
    %85 = vector.load %arg8[%c0_36, %c0_37] : memref<1x32xf32, #tpu.memory_space<vmem>>, vector<1x32xf32>
    %86 = vector.shape_cast %85 : vector<1x32xf32> to vector<1x1x32xf32>
    %87 = vector.broadcast %86 : vector<1x1x32xf32> to vector<2x8x32xf32>
    %88 = arith.addf %82, %87 : vector<2x8x32xf32>
    %c0_38 = arith.constant 0 : index
    %c0_39 = arith.constant 0 : index
    %c0_40 = arith.constant 0 : index
    %89 = vector.load %arg9[%c0_38, %c0_39, %c0_40] : memref<2x8x32xf32, #tpu.memory_space<vmem>>, vector<2x8x32xf32>
    tpu.vector_store %arg9[%c0_38, %c0_39, %c0_40], %88 {strides = array<i32>} : memref<2x8x32xf32, #tpu.memory_space<vmem>>, vector<2x8x32xf32>,
    return
  }
}

</mosaic_0001>

<llo_original>
// kernel: mha_forward.1
$region0: #{mha_forward.1}
  #allocation0 [shape = 'u32[]', space=smem, size = 0x4, offset = 0x4, fixed_abs, tag = 'smem constant byte address 0x4 - core index']
  #allocation1 [shape = 'u32[144,128]{1,0:T(1,128)}', space=vmem, size = 0x12000, scoped, tag = 'internal scratch']
  %s0 = inlined_call_operand.hbm [shape: f32[16,32], index: 0, kind: input, shape index: {}]
  %s1 = inlined_call_operand.hbm [shape: f32[16,32], index: 1, kind: input, shape index: {}]
  %s2 = inlined_call_operand.hbm [shape: f32[16,32], index: 2, kind: input, shape index: {}]
  %s3 = inlined_call_operand.hbm [shape: f32[32,32], index: 3, kind: input, shape index: {}]
  %s4 = inlined_call_operand.vmem [shape: f32[1,32], index: 4, kind: input, shape index: {}]
  %s5 = inlined_call_operand.hbm [shape: f32[32,32], index: 5, kind: input, shape index: {}]
  %s6 = inlined_call_operand.vmem [shape: f32[1,32], index: 6, kind: input, shape index: {}]
  %s7 = inlined_call_operand.hbm [shape: f32[32,128], index: 7, kind: input, shape index: {}]
  %s8 = inlined_call_operand.vmem [shape: f32[1,32], index: 8, kind: input, shape index: {}]
  %s9 = inlined_call_operand.hbm [shape: f32[2,8,32], index: 9, kind: output, shape index: {0}]
  %s10 = inlined_call_operand.vmem [shape: f32[16,32], index: 10, kind: output, shape index: {1}]
  %11 = xla_tuple %s9, %s10
  %s12 = sld [smem:[#allocation0]]
  $region78: #{mha_forward.1} parent=0
    _
  %s14 = ssub.s32 1, %s12
  %s15 = scalar_select 0, %s14, %s12
  $region1: #{mha_forward.1} parent=0
    #allocation2 [shape = 'u8[8192]{0}', space=vmem, size = 0x2000, scoped, tag = 'input window, operand 0, single buffered']
    #allocation3 [shape = 's32[1]{0}', space=sflag, size = 0x4, scoped, tag = 'scoped memory for mha_forward.1']
    #allocation4 [shape = 's32[1]{0}', space=sflag, size = 0x4, scoped, tag = 'scoped memory for mha_forward.1']
    #allocation5 [shape = 'u8[8192]{0}', space=vmem, size = 0x2000, scoped, tag = 'input window, operand 1, single buffered']
    #allocation6 [shape = 's32[1]{0}', space=sflag, size = 0x4, scoped, tag = 'scoped memory for mha_forward.1']
    #allocation7 [shape = 'u8[8192]{0}', space=vmem, size = 0x2000, scoped, tag = 'input window, operand 2, single buffered']
    #allocation8 [shape = 'u8[16384]{0}', space=vmem, size = 0x4000, scoped, tag = 'input window, operand 3, single buffered']
    #allocation9 [shape = 's32[1]{0}', space=sflag, size = 0x4, scoped, tag = 'scoped memory for mha_forward.1']
    #allocation10 [shape = 'u8[16384]{0}', space=vmem, size = 0x4000, scoped, tag = 'input window, operand 5, single buffered']
    #allocation11 [shape = 'u8[16384]{0}', space=vmem, size = 0x4000, scoped, tag = 'input window, operand 7, single buffered']
    #allocation12 [shape = 's32[1]{0}', space=sflag, size = 0x4, scoped, tag = 'scoped memory for mha_forward.1']
    #allocation13 [shape = 'u8[8192]{0}', space=vmem, size = 0x2000, scoped, tag = 'output window, operand 0, single buffered']
    %16 = vsyncpa [#allocation3], 0
    %17 = vsyncpa [#allocation6], 0
    %18 = vsyncpa [#allocation9], 0
    %19 = vsyncpa [#allocation12], 0
    %20 = vsyncpa [#allocation4], 0
    // Predicated region
    $region2: #{mha_forward.1} parent=1 // pred_check
      _
    $region3: #{mha_forward.1} parent=1 // pred_check_branch
      %22 = sbr.rel (0) target = $region5
    $region4: #{mha_forward.1} parent=1 // pred_region
      %s24 = ssub.s32 256, 256
      %25 = vsyncadd [#allocation3], %s24
      %s26 = sshll.u32 [#allocation2], 4
      %s27 = int_to_ptr.vmem [resolvable:$true] %s26
      %32 = dma.hbm_to_vmem [thread:$0]  %s0, 256, %s27, [#allocation3], 128, 128, 8
    $region5: #{mha_forward.1} parent=1 // pred_fallthru
      _
    // Predicated region
    $region6: #{mha_forward.1} parent=1 // pred_check
      _
    $region7: #{mha_forward.1} parent=1 // pred_check_branch
      %34 = sbr.rel (0) target = $region9
    $region8: #{mha_forward.1} parent=1 // pred_region
      %s36 = ssub.s32 256, 256
      %37 = vsyncadd [#allocation6], %s36
      %s38 = sshll.u32 [#allocation5], 4
      %s39 = int_to_ptr.vmem [resolvable:$true] %s38
      %44 = dma.hbm_to_vmem [thread:$0]  %s1, 256, %s39, [#allocation6], 128, 128, 8
    $region9: #{mha_forward.1} parent=1 // pred_fallthru
      _
    // Predicated region
    $region10: #{mha_forward.1} parent=1 // pred_check
      _
    $region11: #{mha_forward.1} parent=1 // pred_check_branch
      %46 = sbr.rel (0) target = $region13
    $region12: #{mha_forward.1} parent=1 // pred_region
      %s48 = ssub.s32 256, 256
      %49 = vsyncadd [#allocation6], %s48
      %s50 = sshll.u32 [#allocation7], 4
      %s51 = int_to_ptr.vmem [resolvable:$true] %s50
      %56 = dma.hbm_to_vmem [thread:$0]  %s2, 256, %s51, [#allocation6], 128, 128, 8
    $region13: #{mha_forward.1} parent=1 // pred_fallthru
      _
    // Predicated region
    $region14: #{mha_forward.1} parent=1 // pred_check
      _
    $region15: #{mha_forward.1} parent=1 // pred_check_branch
      %58 = sbr.rel (0) target = $region17
    $region16: #{mha_forward.1} parent=1 // pred_region
      %s60 = ssub.s32 512, 512
      %61 = vsyncadd [#allocation9], %s60
      %s62 = sshll.u32 [#allocation8], 4
      %s63 = int_to_ptr.vmem [resolvable:$true] %s62
      %68 = dma.hbm_to_vmem [thread:$0]  %s3, 512, %s63, [#allocation9], 128, 128, 8
    $region17: #{mha_forward.1} parent=1 // pred_fallthru
      _
    // Predicated region
    $region18: #{mha_forward.1} parent=1 // pred_check
      _
    $region19: #{mha_forward.1} parent=1 // pred_check_branch
      %70 = sbr.rel (0) target = $region21
    $region20: #{mha_forward.1} parent=1 // pred_region
      _
    $region21: #{mha_forward.1} parent=1 // pred_fallthru
      _
    // Predicated region
    $region22: #{mha_forward.1} parent=1 // pred_check
      _
    $region23: #{mha_forward.1} parent=1 // pred_check_branch
      %72 = sbr.rel (0) target = $region25
    $region24: #{mha_forward.1} parent=1 // pred_region
      %s74 = ssub.s32 512, 512
      %75 = vsyncadd [#allocation9], %s74
      %s76 = sshll.u32 [#allocation10], 4
      %s77 = int_to_ptr.vmem [resolvable:$true] %s76
      %82 = dma.hbm_to_vmem [thread:$0]  %s5, 512, %s77, [#allocation9], 128, 128, 8
    $region25: #{mha_forward.1} parent=1 // pred_fallthru
      _
    // Predicated region
    $region26: #{mha_forward.1} parent=1 // pred_check
      _
    $region27: #{mha_forward.1} parent=1 // pred_check_branch
      %84 = sbr.rel (0) target = $region29
    $region28: #{mha_forward.1} parent=1 // pred_region
      _
    $region29: #{mha_forward.1} parent=1 // pred_fallthru
      _
    // Predicated region
    $region30: #{mha_forward.1} parent=1 // pred_check
      _
    $region31: #{mha_forward.1} parent=1 // pred_check_branch
      %86 = sbr.rel (0) target = $region33
    $region32: #{mha_forward.1} parent=1 // pred_region
      %s88 = ssub.s32 512, 512
      %89 = vsyncadd [#allocation12], %s88
      %s90 = sshll.u32 [#allocation11], 4
      %s91 = int_to_ptr.vmem [resolvable:$true] %s90
      %96 = dma.hbm_to_vmem [thread:$0]  %s7, 512, %s91, [#allocation12], 128, 128, 8
    $region33: #{mha_forward.1} parent=1 // pred_fallthru
      _
    // Predicated region
    $region34: #{mha_forward.1} parent=1 // pred_check
      _
    $region35: #{mha_forward.1} parent=1 // pred_check_branch
      %98 = sbr.rel (0) target = $region37
    $region36: #{mha_forward.1} parent=1 // pred_region
      _
    $region37: #{mha_forward.1} parent=1 // pred_fallthru
      _
    // Predicated region
    $region38: #{mha_forward.1} parent=1 // pred_check
      _
    $region39: #{mha_forward.1} parent=1 // pred_check_branch
      %100 = sbr.rel (0) target = $region41
    $region40: #{mha_forward.1} parent=1 // pred_region
      %101 = dma.done [#allocation3], 256
    $region41: #{mha_forward.1} parent=1 // pred_fallthru
      _
    // Predicated region
    $region42: #{mha_forward.1} parent=1 // pred_check
      _
    $region43: #{mha_forward.1} parent=1 // pred_check_branch
      %103 = sbr.rel (0) target = $region45
    $region44: #{mha_forward.1} parent=1 // pred_region
      %104 = dma.done [#allocation6], 256
    $region45: #{mha_forward.1} parent=1 // pred_fallthru
      _
    // Predicated region
    $region46: #{mha_forward.1} parent=1 // pred_check
      _
    $region47: #{mha_forward.1} parent=1 // pred_check_branch
      %106 = sbr.rel (0) target = $region49
    $region48: #{mha_forward.1} parent=1 // pred_region
      %107 = dma.done [#allocation6], 256
    $region49: #{mha_forward.1} parent=1 // pred_fallthru
      _
    // Predicated region
    $region50: #{mha_forward.1} parent=1 // pred_check
      _
    $region51: #{mha_forward.1} parent=1 // pred_check_branch
      %109 = sbr.rel (0) target = $region53
    $region52: #{mha_forward.1} parent=1 // pred_region
      %110 = dma.done [#allocation9], 512
    $region53: #{mha_forward.1} parent=1 // pred_fallthru
      _
    // Predicated region
    $region54: #{mha_forward.1} parent=1 // pred_check
      _
    $region55: #{mha_forward.1} parent=1 // pred_check_branch
      %112 = sbr.rel (0) target = $region57
    $region56: #{mha_forward.1} parent=1 // pred_region
      %113 = dma.done [#allocation9], 512
    $region57: #{mha_forward.1} parent=1 // pred_fallthru
      _
    // Predicated region
    $region58: #{mha_forward.1} parent=1 // pred_check
      _
    $region59: #{mha_forward.1} parent=1 // pred_check_branch
      %115 = sbr.rel (0) target = $region61
    $region60: #{mha_forward.1} parent=1 // pred_region
      %116 = dma.done [#allocation12], 512
    $region61: #{mha_forward.1} parent=1 // pred_fallthru
      _
    %v117 = vld [vmem:[#allocation2] sm:$0xff]
    %v118 = vld [vmem:[#allocation2 + $0x8] sm:$0xff]
    %v119 = vld [vmem:[#allocation8] sm:$0xff]
    %v120 = vld [vmem:[#allocation8 + $0x8] sm:$0xff]
    %v121 = vld [vmem:[#allocation8 + $0x10] sm:$0xff]
    %v122 = vld [vmem:[#allocation8 + $0x18] sm:$0xff]
    %v123 = vld [vmem:[%s4] sm:$0x1]
    %v125 = vlaneseq
    %v126 = vshrl.u32 %v125, 7
    %v127 = vsub.s32 0, %v126
    %v128 = vrot.slane %v123, %v127
    %vm130 = vcmask 261120
    %v132 = vsel %vm130, %v117, 0
    %v135 = vsel %vm130, %v118, 0
    %137 = vmatprep.subr.mxu0 0.0
    %138 = vmatpush1.msra.mxu0 0.0
    %139 = vmatprep.subr.mxu0 0.0
    %140 = vmatpush1.msra.mxu0 0.0
    %141 = vmatprep.subr.mxu0 0.0
    %142 = vmatpush1.msra.mxu0 0.0
    %143 = vmatprep.subr.mxu0 0.0
    %144 = vmatpush1.msra.mxu0 0.0
    %145 = vmatprep.subr.mxu0 0.0
    %146 = vmatpush1.msra.mxu0 0.0
    %147 = vmatprep.subr.mxu0 0.0
    %148 = vmatpush1.msra.mxu0 0.0
    %149 = vmatprep.subr.mxu0 0.0
    %150 = vmatpush1.msra.mxu0 0.0
    %151 = vmatprep.subr.mxu0 0.0
    %152 = vmatpush1.msra.mxu0 0.0
    %153 = vmatprep.subr.mxu0 0.0
    %154 = vmatpush1.msra.mxu0 0.0
    %155 = vmatprep.subr.mxu0 0.0
    %156 = vmatpush1.msra.mxu0 0.0
    %157 = vmatprep.subr.mxu0 0.0
    %158 = vmatpush1.msra.mxu0 0.0
    %159 = vmatprep.subr.mxu0 0.0
    %160 = vmatpush1.msra.mxu0 0.0
    %161 = vmatprep.subr.mxu0 0.0
    %162 = vmatpush1.msra.mxu0 %v122
    %163 = vmatprep.subr.mxu0 0.0
    %164 = vmatpush1.msra.mxu0 %v121
    %165 = vmatprep.subr.mxu0 0.0
    %166 = vmatpush1.msra.mxu0 %v120
    %167 = vmatprep.subr.mxu0 0.0
    %168 = vmatpush1.msra.mxu0 %v119
    %169 = vmatprep.subr.mxu0 0.0
    %170 = vmatpush2.msra.mxu0 0.0
    %171 = vmatprep.subr.mxu0 0.0
    %172 = vmatpush2.msra.mxu0 0.0
    %173 = vmatprep.subr.mxu0 0.0
    %174 = vmatpush2.msra.mxu0 0.0
    %175 = vmatprep.subr.mxu0 0.0
    %176 = vmatpush2.msra.mxu0 0.0
    %177 = vmatprep.subr.mxu0 0.0
    %178 = vmatpush2.msra.mxu0 0.0
    %179 = vmatprep.subr.mxu0 0.0
    %180 = vmatpush2.msra.mxu0 0.0
    %181 = vmatprep.subr.mxu0 0.0
    %182 = vmatpush2.msra.mxu0 0.0
    %183 = vmatprep.subr.mxu0 0.0
    %184 = vmatpush2.msra.mxu0 0.0
    %185 = vmatprep.subr.mxu0 0.0
    %186 = vmatpush2.msra.mxu0 0.0
    %187 = vmatprep.subr.mxu0 0.0
    %188 = vmatpush2.msra.mxu0 0.0
    %189 = vmatprep.subr.mxu0 0.0
    %190 = vmatpush2.msra.mxu0 0.0
    %191 = vmatprep.subr.mxu0 0.0
    %192 = vmatpush2.msra.mxu0 0.0
    %193 = vmatprep.subr.mxu0 0.0
    %194 = vmatpush2.msra.mxu0 0.0
    %195 = vmatprep.subr.mxu0 0.0
    %196 = vmatpush2.msra.mxu0 0.0
    %197 = vmatprep.subr.mxu0 0.0
    %198 = vmatpush2.msra.mxu0 0.0
    %199 = vmatprep.subr.mxu0 0.0
    %200 = vmatpush2.msra.mxu0 0.0
    %201 = vmatprep.mubr.f32.mxu0 0.0
    %202 = vmatmul.mubr.f32.gmra.mxu0 %v132
    %v203 = vpop.f32.mrf.mxu0
    %v204 = vadd.f32 %v128, %v203
    %v205 = vpop.f32.mrf.mxu0
    %206 = vmatprep.mubr.f32.mxu0 0.0
    %207 = vmatmul.mubr.f32.gmra.mxu0 %v135
    %v208 = vpop.f32.mrf.mxu0
    %v209 = vadd.f32 %v128, %v208
    %v210 = vpop.f32.mrf.mxu0
    %211 = vdwg.mxu0
    %v212 = vld [vmem:[#allocation5] sm:$0xff]
    %v213 = vld [vmem:[#allocation5 + $0x8] sm:$0xff]
    %v214 = vld [vmem:[#allocation10] sm:$0xff]
    %v215 = vld [vmem:[#allocation10 + $0x8] sm:$0xff]
    %v216 = vld [vmem:[#allocation10 + $0x10] sm:$0xff]
    %v217 = vld [vmem:[#allocation10 + $0x18] sm:$0xff]
    %v218 = vld [vmem:[%s6] sm:$0x1]
    %v220 = vlaneseq
    %v221 = vshrl.u32 %v220, 7
    %v222 = vsub.s32 0, %v221
    %v223 = vrot.slane %v218, %v222
    %v226 = vsel %vm130, %v212, 0
    %v229 = vsel %vm130, %v213, 0
    %231 = vmatprep.subr.mxu0 0.0
    %232 = vmatpush1.msra.mxu0 0.0
    %233 = vmatprep.subr.mxu0 0.0
    %234 = vmatpush1.msra.mxu0 0.0
    %235 = vmatprep.subr.mxu0 0.0
    %236 = vmatpush1.msra.mxu0 0.0
    %237 = vmatprep.subr.mxu0 0.0
    %238 = vmatpush1.msra.mxu0 0.0
    %239 = vmatprep.subr.mxu0 0.0
    %240 = vmatpush1.msra.mxu0 0.0
    %241 = vmatprep.subr.mxu0 0.0
    %242 = vmatpush1.msra.mxu0 0.0
    %243 = vmatprep.subr.mxu0 0.0
    %244 = vmatpush1.msra.mxu0 0.0
    %245 = vmatprep.subr.mxu0 0.0
    %246 = vmatpush1.msra.mxu0 0.0
    %247 = vmatprep.subr.mxu0 0.0
    %248 = vmatpush1.msra.mxu0 0.0
    %249 = vmatprep.subr.mxu0 0.0
    %250 = vmatpush1.msra.mxu0 0.0
    %251 = vmatprep.subr.mxu0 0.0
    %252 = vmatpush1.msra.mxu0 0.0
    %253 = vmatprep.subr.mxu0 0.0
    %254 = vmatpush1.msra.mxu0 0.0
    %255 = vmatprep.subr.mxu0 0.0
    %256 = vmatpush1.msra.mxu0 %v217
    %257 = vmatprep.subr.mxu0 0.0
    %258 = vmatpush1.msra.mxu0 %v216
    %259 = vmatprep.subr.mxu0 0.0
    %260 = vmatpush1.msra.mxu0 %v215
    %261 = vmatprep.subr.mxu0 0.0
    %262 = vmatpush1.msra.mxu0 %v214
    %263 = vmatprep.subr.mxu0 0.0
    %264 = vmatpush2.msra.mxu0 0.0
    %265 = vmatprep.subr.mxu0 0.0
    %266 = vmatpush2.msra.mxu0 0.0
    %267 = vmatprep.subr.mxu0 0.0
    %268 = vmatpush2.msra.mxu0 0.0
    %269 = vmatprep.subr.mxu0 0.0
    %270 = vmatpush2.msra.mxu0 0.0
    %271 = vmatprep.subr.mxu0 0.0
    %272 = vmatpush2.msra.mxu0 0.0
    %273 = vmatprep.subr.mxu0 0.0
    %274 = vmatpush2.msra.mxu0 0.0
    %275 = vmatprep.subr.mxu0 0.0
    %276 = vmatpush2.msra.mxu0 0.0
    %277 = vmatprep.subr.mxu0 0.0
    %278 = vmatpush2.msra.mxu0 0.0
    %279 = vmatprep.subr.mxu0 0.0
    %280 = vmatpush2.msra.mxu0 0.0
    %281 = vmatprep.subr.mxu0 0.0
    %282 = vmatpush2.msra.mxu0 0.0
    %283 = vmatprep.subr.mxu0 0.0
    %284 = vmatpush2.msra.mxu0 0.0
    %285 = vmatprep.subr.mxu0 0.0
    %286 = vmatpush2.msra.mxu0 0.0
    %287 = vmatprep.subr.mxu0 0.0
    %288 = vmatpush2.msra.mxu0 0.0
    %289 = vmatprep.subr.mxu0 0.0
    %290 = vmatpush2.msra.mxu0 0.0
    %291 = vmatprep.subr.mxu0 0.0
    %292 = vmatpush2.msra.mxu0 0.0
    %293 = vmatprep.subr.mxu0 0.0
    %294 = vmatpush2.msra.mxu0 0.0
    %295 = vmatprep.mubr.f32.mxu0 0.0
    %296 = vmatmul.mubr.f32.gmra.mxu0 %v226
    %v297 = vpop.f32.mrf.mxu0
    %v298 = vadd.f32 %v223, %v297
    %v299 = vpop.f32.mrf.mxu0
    %300 = vmatprep.mubr.f32.mxu0 0.0
    %301 = vmatmul.mubr.f32.gmra.mxu0 %v229
    %v302 = vpop.f32.mrf.mxu0
    %v303 = vadd.f32 %v223, %v302
    %v304 = vpop.f32.mrf.mxu0
    %305 = vdwg.mxu0
    %v306 = vld [vmem:[#allocation7] sm:$0xff]
    %v307 = vld [vmem:[#allocation7 + $0x8] sm:$0xff]
    %v308 = vld [vmem:[#allocation11] sm:$0xff]
    %v309 = vld [vmem:[#allocation11 + $0x8] sm:$0xff]
    %v310 = vld [vmem:[#allocation11 + $0x10] sm:$0xff]
    %v311 = vld [vmem:[#allocation11 + $0x18] sm:$0xff]
    %v313 = vsel %vm130, %v306, 0
    %v316 = vsel %vm130, %v307, 0
    %318 = vmatprep.subr.mxu0 0.0
    %319 = vmatpush1.msra.mxu0 0.0
    %320 = vmatprep.subr.mxu0 0.0
    %321 = vmatpush1.msra.mxu0 0.0
    %322 = vmatprep.subr.mxu0 0.0
    %323 = vmatpush1.msra.mxu0 0.0
    %324 = vmatprep.subr.mxu0 0.0
    %325 = vmatpush1.msra.mxu0 0.0
    %326 = vmatprep.subr.mxu0 0.0
    %327 = vmatpush1.msra.mxu0 0.0
    %328 = vmatprep.subr.mxu0 0.0
    %329 = vmatpush1.msra.mxu0 0.0
    %330 = vmatprep.subr.mxu0 0.0
    %331 = vmatpush1.msra.mxu0 0.0
    %332 = vmatprep.subr.mxu0 0.0
    %333 = vmatpush1.msra.mxu0 0.0
    %334 = vmatprep.subr.mxu0 0.0
    %335 = vmatpush1.msra.mxu0 0.0
    %336 = vmatprep.subr.mxu0 0.0
    %337 = vmatpush1.msra.mxu0 0.0
    %338 = vmatprep.subr.mxu0 0.0
    %339 = vmatpush1.msra.mxu0 0.0
    %340 = vmatprep.subr.mxu0 0.0
    %341 = vmatpush1.msra.mxu0 0.0
    %342 = vmatprep.subr.mxu0 0.0
    %343 = vmatpush1.msra.mxu0 %v311
    %344 = vmatprep.subr.mxu0 0.0
    %345 = vmatpush1.msra.mxu0 %v310
    %346 = vmatprep.subr.mxu0 0.0
    %347 = vmatpush1.msra.mxu0 %v309
    %348 = vmatprep.subr.mxu0 0.0
    %349 = vmatpush1.msra.mxu0 %v308
    %350 = vmatprep.subr.mxu0 0.0
    %351 = vmatpush2.msra.mxu0 0.0
    %352 = vmatprep.subr.mxu0 0.0
    %353 = vmatpush2.msra.mxu0 0.0
    %354 = vmatprep.subr.mxu0 0.0
    %355 = vmatpush2.msra.mxu0 0.0
    %356 = vmatprep.subr.mxu0 0.0
    %357 = vmatpush2.msra.mxu0 0.0
    %358 = vmatprep.subr.mxu0 0.0
    %359 = vmatpush2.msra.mxu0 0.0
    %360 = vmatprep.subr.mxu0 0.0
    %361 = vmatpush2.msra.mxu0 0.0
    %362 = vmatprep.subr.mxu0 0.0
    %363 = vmatpush2.msra.mxu0 0.0
    %364 = vmatprep.subr.mxu0 0.0
    %365 = vmatpush2.msra.mxu0 0.0
    %366 = vmatprep.subr.mxu0 0.0
    %367 = vmatpush2.msra.mxu0 0.0
    %368 = vmatprep.subr.mxu0 0.0
    %369 = vmatpush2.msra.mxu0 0.0
    %370 = vmatprep.subr.mxu0 0.0
    %371 = vmatpush2.msra.mxu0 0.0
    %372 = vmatprep.subr.mxu0 0.0
    %373 = vmatpush2.msra.mxu0 0.0
    %374 = vmatprep.subr.mxu0 0.0
    %375 = vmatpush2.msra.mxu0 0.0
    %376 = vmatprep.subr.mxu0 0.0
    %377 = vmatpush2.msra.mxu0 0.0
    %378 = vmatprep.subr.mxu0 0.0
    %379 = vmatpush2.msra.mxu0 0.0
    %380 = vmatprep.subr.mxu0 0.0
    %381 = vmatpush2.msra.mxu0 0.0
    %382 = vmatprep.mubr.f32.mxu0 0.0
    %383 = vmatmul.mubr.f32.gmra.mxu0 %v313
    %v384 = vpop.f32.mrf.mxu0
    %v385 = vadd.f32 0.0, %v384
    %v386 = vpop.f32.mrf.mxu0
    %387 = vmatprep.mubr.f32.mxu0 0.0
    %388 = vmatmul.mubr.f32.gmra.mxu0 %v316
    %v389 = vpop.f32.mrf.mxu0
    %v390 = vadd.f32 0.0, %v389
    %v391 = vpop.f32.mrf.mxu0
    %392 = vdwg.mxu0
    %vm393 = vcmask 64512
    %v395 = vsel %vm393, %v204, 0
    %v398 = vsel %vm393, %v298, 0
    %400 = vmatprep.subr.mxu0 0.0
    %401 = vmatpush1.xpose.msra.mxu0 0.0
    %402 = vmatprep.subr.mxu0 0.0
    %403 = vmatpush1.xpose.msra.mxu0 0.0
    %404 = vmatprep.subr.mxu0 0.0
    %405 = vmatpush1.xpose.msra.mxu0 0.0
    %406 = vmatprep.subr.mxu0 0.0
    %407 = vmatpush1.xpose.msra.mxu0 0.0
    %408 = vmatprep.subr.mxu0 0.0
    %409 = vmatpush1.xpose.msra.mxu0 0.0
    %410 = vmatprep.subr.mxu0 0.0
    %411 = vmatpush1.xpose.msra.mxu0 0.0
    %412 = vmatprep.subr.mxu0 0.0
    %413 = vmatpush1.xpose.msra.mxu0 0.0
    %414 = vmatprep.subr.mxu0 0.0
    %415 = vmatpush1.xpose.msra.mxu0 0.0
    %416 = vmatprep.subr.mxu0 0.0
    %417 = vmatpush1.xpose.msra.mxu0 0.0
    %418 = vmatprep.subr.mxu0 0.0
    %419 = vmatpush1.xpose.msra.mxu0 0.0
    %420 = vmatprep.subr.mxu0 0.0
    %421 = vmatpush1.xpose.msra.mxu0 0.0
    %422 = vmatprep.subr.mxu0 0.0
    %423 = vmatpush1.xpose.msra.mxu0 0.0
    %424 = vmatprep.subr.mxu0 0.0
    %425 = vmatpush1.xpose.msra.mxu0 0.0
    %426 = vmatprep.subr.mxu0 0.0
    %427 = vmatpush1.xpose.msra.mxu0 0.0
    %428 = vmatprep.subr.mxu0 0.0
    %429 = vmatpush1.xpose.msra.mxu0 0.0
    %430 = vmatprep.subr.mxu0 0.0
    %431 = vmatpush1.xpose.msra.mxu0 %v398
    %432 = vmatprep.subr.mxu0 0.0
    %433 = vmatpush2.xpose.msra.mxu0 0.0
    %434 = vmatprep.subr.mxu0 0.0
    %435 = vmatpush2.xpose.msra.mxu0 0.0
    %436 = vmatprep.subr.mxu0 0.0
    %437 = vmatpush2.xpose.msra.mxu0 0.0
    %438 = vmatprep.subr.mxu0 0.0
    %439 = vmatpush2.xpose.msra.mxu0 0.0
    %440 = vmatprep.subr.mxu0 0.0
    %441 = vmatpush2.xpose.msra.mxu0 0.0
    %442 = vmatprep.subr.mxu0 0.0
    %443 = vmatpush2.xpose.msra.mxu0 0.0
    %444 = vmatprep.subr.mxu0 0.0
    %445 = vmatpush2.xpose.msra.mxu0 0.0
    %446 = vmatprep.subr.mxu0 0.0
    %447 = vmatpush2.xpose.msra.mxu0 0.0
    %448 = vmatprep.subr.mxu0 0.0
    %449 = vmatpush2.xpose.msra.mxu0 0.0
    %450 = vmatprep.subr.mxu0 0.0
    %451 = vmatpush2.xpose.msra.mxu0 0.0
    %452 = vmatprep.subr.mxu0 0.0
    %453 = vmatpush2.xpose.msra.mxu0 0.0
    %454 = vmatprep.subr.mxu0 0.0
    %455 = vmatpush2.xpose.msra.mxu0 0.0
    %456 = vmatprep.subr.mxu0 0.0
    %457 = vmatpush2.xpose.msra.mxu0 0.0
    %458 = vmatprep.subr.mxu0 0.0
    %459 = vmatpush2.xpose.msra.mxu0 0.0
    %460 = vmatprep.subr.mxu0 0.0
    %461 = vmatpush2.xpose.msra.mxu0 0.0
    %462 = vmatprep.subr.mxu0 0.0
    %463 = vmatpush2.xpose.msra.mxu0 0.0
    %464 = vmatprep.mubr.f32.mxu0 0.0
    %465 = vmatmul.mubr.f32.gmra.mxu0 %v395
    %v466 = vpop.f32.mrf.mxu0
    %v467 = vadd.f32 0.0, %v466
    %v468 = vpop.f32.mrf.mxu0
    %469 = vdwg.mxu0
    %v471 = vsel %vm393, %v209, 0
    %v474 = vsel %vm393, %v303, 0
    %476 = vmatprep.subr.mxu0 0.0
    %477 = vmatpush1.xpose.msra.mxu0 0.0
    %478 = vmatprep.subr.mxu0 0.0
    %479 = vmatpush1.xpose.msra.mxu0 0.0
    %480 = vmatprep.subr.mxu0 0.0
    %481 = vmatpush1.xpose.msra.mxu0 0.0
    %482 = vmatprep.subr.mxu0 0.0
    %483 = vmatpush1.xpose.msra.mxu0 0.0
    %484 = vmatprep.subr.mxu0 0.0
    %485 = vmatpush1.xpose.msra.mxu0 0.0
    %486 = vmatprep.subr.mxu0 0.0
    %487 = vmatpush1.xpose.msra.mxu0 0.0
    %488 = vmatprep.subr.mxu0 0.0
    %489 = vmatpush1.xpose.msra.mxu0 0.0
    %490 = vmatprep.subr.mxu0 0.0
    %491 = vmatpush1.xpose.msra.mxu0 0.0
    %492 = vmatprep.subr.mxu0 0.0
    %493 = vmatpush1.xpose.msra.mxu0 0.0
    %494 = vmatprep.subr.mxu0 0.0
    %495 = vmatpush1.xpose.msra.mxu0 0.0
    %496 = vmatprep.subr.mxu0 0.0
    %497 = vmatpush1.xpose.msra.mxu0 0.0
    %498 = vmatprep.subr.mxu0 0.0
    %499 = vmatpush1.xpose.msra.mxu0 0.0
    %500 = vmatprep.subr.mxu0 0.0
    %501 = vmatpush1.xpose.msra.mxu0 0.0
    %502 = vmatprep.subr.mxu0 0.0
    %503 = vmatpush1.xpose.msra.mxu0 0.0
    %504 = vmatprep.subr.mxu0 0.0
    %505 = vmatpush1.xpose.msra.mxu0 0.0
    %506 = vmatprep.subr.mxu0 0.0
    %507 = vmatpush1.xpose.msra.mxu0 %v474
    %508 = vmatprep.subr.mxu0 0.0
    %509 = vmatpush2.xpose.msra.mxu0 0.0
    %510 = vmatprep.subr.mxu0 0.0
    %511 = vmatpush2.xpose.msra.mxu0 0.0
    %512 = vmatprep.subr.mxu0 0.0
    %513 = vmatpush2.xpose.msra.mxu0 0.0
    %514 = vmatprep.subr.mxu0 0.0
    %515 = vmatpush2.xpose.msra.mxu0 0.0
    %516 = vmatprep.subr.mxu0 0.0
    %517 = vmatpush2.xpose.msra.mxu0 0.0
    %518 = vmatprep.subr.mxu0 0.0
    %519 = vmatpush2.xpose.msra.mxu0 0.0
    %520 = vmatprep.subr.mxu0 0.0
    %521 = vmatpush2.xpose.msra.mxu0 0.0
    %522 = vmatprep.subr.mxu0 0.0
    %523 = vmatpush2.xpose.msra.mxu0 0.0
    %524 = vmatprep.subr.mxu0 0.0
    %525 = vmatpush2.xpose.msra.mxu0 0.0
    %526 = vmatprep.subr.mxu0 0.0
    %527 = vmatpush2.xpose.msra.mxu0 0.0
    %528 = vmatprep.subr.mxu0 0.0
    %529 = vmatpush2.xpose.msra.mxu0 0.0
    %530 = vmatprep.subr.mxu0 0.0
    %531 = vmatpush2.xpose.msra.mxu0 0.0
    %532 = vmatprep.subr.mxu0 0.0
    %533 = vmatpush2.xpose.msra.mxu0 0.0
    %534 = vmatprep.subr.mxu0 0.0
    %535 = vmatpush2.xpose.msra.mxu0 0.0
    %536 = vmatprep.subr.mxu0 0.0
    %537 = vmatpush2.xpose.msra.mxu0 0.0
    %538 = vmatprep.subr.mxu0 0.0
    %539 = vmatpush2.xpose.msra.mxu0 0.0
    %540 = vmatprep.mubr.f32.mxu0 0.0
    %541 = vmatmul.mubr.f32.gmra.mxu0 %v471
    %v542 = vpop.f32.mrf.mxu0
    %v543 = vadd.f32 0.0, %v542
    %v544 = vpop.f32.mrf.mxu0
    %545 = vdwg.mxu0
    %v546 = vsel %vm393, %v467, -inf
    %547 = vmax.xlane.f32.xlu0 %v546
    %v548 = vpop.xlane.xlu0 %547
    %v549 = vsel %vm393, %v543, -inf
    %550 = vmax.xlane.f32.xlu0 %v549
    %v551 = vpop.xlane.xlu0 %550
    %v552 = vsub.f32 %v467, %v548
    %v553 = vsub.f32 %v543, %v551
    %v554 = vmul.f32 %v552, 1.442695
    %v555 = vpow.pop %v554
    %v556 = vmul.f32 %v553, 1.442695
    %v557 = vpow.pop %v556
    %v558 = vsel %vm393, %v555, 0.0
    %559 = vadd.xlane.f32.xlu0 %v558
    %v560 = vpop.xlane.xlu0 %559
    %v561 = vsel %vm393, %v557, 0.0
    %562 = vadd.xlane.f32.xlu0 %v561
    %v563 = vpop.xlane.xlu0 %562
    %v564 = vrcp.pop %v560
    %v565 = vmul.f32 %v555, %v564
    %v566 = vrcp.pop %v563
    %v567 = vmul.f32 %v557, %v566
    %568 = vrot.lane.b32.xlu0 %v204, 120
    %v569 = vpop.permute.xlu0 %568
    %570 = vrot.lane.b32.xlu0 %v298, 120
    %v571 = vpop.permute.xlu0 %570
    %v572 = vsel %vm393, %v569, 0
    %v574 = vsel %vm393, %v571, 0
    %576 = vmatprep.subr.mxu0 0.0
    %577 = vmatpush1.xpose.msra.mxu0 0.0
    %578 = vmatprep.subr.mxu0 0.0
    %579 = vmatpush1.xpose.msra.mxu0 0.0
    %580 = vmatprep.subr.mxu0 0.0
    %581 = vmatpush1.xpose.msra.mxu0 0.0
    %582 = vmatprep.subr.mxu0 0.0
    %583 = vmatpush1.xpose.msra.mxu0 0.0
    %584 = vmatprep.subr.mxu0 0.0
    %585 = vmatpush1.xpose.msra.mxu0 0.0
    %586 = vmatprep.subr.mxu0 0.0
    %587 = vmatpush1.xpose.msra.mxu0 0.0
    %588 = vmatprep.subr.mxu0 0.0
    %589 = vmatpush1.xpose.msra.mxu0 0.0
    %590 = vmatprep.subr.mxu0 0.0
    %591 = vmatpush1.xpose.msra.mxu0 0.0
    %592 = vmatprep.subr.mxu0 0.0
    %593 = vmatpush1.xpose.msra.mxu0 0.0
    %594 = vmatprep.subr.mxu0 0.0
    %595 = vmatpush1.xpose.msra.mxu0 0.0
    %596 = vmatprep.subr.mxu0 0.0
    %597 = vmatpush1.xpose.msra.mxu0 0.0
    %598 = vmatprep.subr.mxu0 0.0
    %599 = vmatpush1.xpose.msra.mxu0 0.0
    %600 = vmatprep.subr.mxu0 0.0
    %601 = vmatpush1.xpose.msra.mxu0 0.0
    %602 = vmatprep.subr.mxu0 0.0
    %603 = vmatpush1.xpose.msra.mxu0 0.0
    %604 = vmatprep.subr.mxu0 0.0
    %605 = vmatpush1.xpose.msra.mxu0 0.0
    %606 = vmatprep.subr.mxu0 0.0
    %607 = vmatpush1.xpose.msra.mxu0 %v574
    %608 = vmatprep.subr.mxu0 0.0
    %609 = vmatpush2.xpose.msra.mxu0 0.0
    %610 = vmatprep.subr.mxu0 0.0
    %611 = vmatpush2.xpose.msra.mxu0 0.0
    %612 = vmatprep.subr.mxu0 0.0
    %613 = vmatpush2.xpose.msra.mxu0 0.0
    %614 = vmatprep.subr.mxu0 0.0
    %615 = vmatpush2.xpose.msra.mxu0 0.0
    %616 = vmatprep.subr.mxu0 0.0
    %617 = vmatpush2.xpose.msra.mxu0 0.0
    %618 = vmatprep.subr.mxu0 0.0
    %619 = vmatpush2.xpose.msra.mxu0 0.0
    %620 = vmatprep.subr.mxu0 0.0
    %621 = vmatpush2.xpose.msra.mxu0 0.0
    %622 = vmatprep.subr.mxu0 0.0
    %623 = vmatpush2.xpose.msra.mxu0 0.0
    %624 = vmatprep.subr.mxu0 0.0
    %625 = vmatpush2.xpose.msra.mxu0 0.0
    %626 = vmatprep.subr.mxu0 0.0
    %627 = vmatpush2.xpose.msra.mxu0 0.0
    %628 = vmatprep.subr.mxu0 0.0
    %629 = vmatpush2.xpose.msra.mxu0 0.0
    %630 = vmatprep.subr.mxu0 0.0
    %631 = vmatpush2.xpose.msra.mxu0 0.0
    %632 = vmatprep.subr.mxu0 0.0
    %633 = vmatpush2.xpose.msra.mxu0 0.0
    %634 = vmatprep.subr.mxu0 0.0
    %635 = vmatpush2.xpose.msra.mxu0 0.0
    %636 = vmatprep.subr.mxu0 0.0
    %637 = vmatpush2.xpose.msra.mxu0 0.0
    %638 = vmatprep.subr.mxu0 0.0
    %639 = vmatpush2.xpose.msra.mxu0 0.0
    %640 = vmatprep.mubr.f32.mxu0 0.0
    %641 = vmatmul.mubr.f32.gmra.mxu0 %v572
    %v642 = vpop.f32.mrf.mxu0
    %v643 = vadd.f32 0.0, %v642
    %v644 = vpop.f32.mrf.mxu0
    %645 = vdwg.mxu0
    %646 = vrot.lane.b32.xlu0 %v209, 120
    %v647 = vpop.permute.xlu0 %646
    %648 = vrot.lane.b32.xlu0 %v303, 120
    %v649 = vpop.permute.xlu0 %648
    %v650 = vsel %vm393, %v647, 0
    %v652 = vsel %vm393, %v649, 0
    %654 = vmatprep.subr.mxu0 0.0
    %655 = vmatpush1.xpose.msra.mxu0 0.0
    %656 = vmatprep.subr.mxu0 0.0
    %657 = vmatpush1.xpose.msra.mxu0 0.0
    %658 = vmatprep.subr.mxu0 0.0
    %659 = vmatpush1.xpose.msra.mxu0 0.0
    %660 = vmatprep.subr.mxu0 0.0
    %661 = vmatpush1.xpose.msra.mxu0 0.0
    %662 = vmatprep.subr.mxu0 0.0
    %663 = vmatpush1.xpose.msra.mxu0 0.0
    %664 = vmatprep.subr.mxu0 0.0
    %665 = vmatpush1.xpose.msra.mxu0 0.0
    %666 = vmatprep.subr.mxu0 0.0
    %667 = vmatpush1.xpose.msra.mxu0 0.0
    %668 = vmatprep.subr.mxu0 0.0
    %669 = vmatpush1.xpose.msra.mxu0 0.0
    %670 = vmatprep.subr.mxu0 0.0
    %671 = vmatpush1.xpose.msra.mxu0 0.0
    %672 = vmatprep.subr.mxu0 0.0
    %673 = vmatpush1.xpose.msra.mxu0 0.0
    %674 = vmatprep.subr.mxu0 0.0
    %675 = vmatpush1.xpose.msra.mxu0 0.0
    %676 = vmatprep.subr.mxu0 0.0
    %677 = vmatpush1.xpose.msra.mxu0 0.0
    %678 = vmatprep.subr.mxu0 0.0
    %679 = vmatpush1.xpose.msra.mxu0 0.0
    %680 = vmatprep.subr.mxu0 0.0
    %681 = vmatpush1.xpose.msra.mxu0 0.0
    %682 = vmatprep.subr.mxu0 0.0
    %683 = vmatpush1.xpose.msra.mxu0 0.0
    %684 = vmatprep.subr.mxu0 0.0
    %685 = vmatpush1.xpose.msra.mxu0 %v652
    %686 = vmatprep.subr.mxu0 0.0
    %687 = vmatpush2.xpose.msra.mxu0 0.0
    %688 = vmatprep.subr.mxu0 0.0
    %689 = vmatpush2.xpose.msra.mxu0 0.0
    %690 = vmatprep.subr.mxu0 0.0
    %691 = vmatpush2.xpose.msra.mxu0 0.0
    %692 = vmatprep.subr.mxu0 0.0
    %693 = vmatpush2.xpose.msra.mxu0 0.0
    %694 = vmatprep.subr.mxu0 0.0
    %695 = vmatpush2.xpose.msra.mxu0 0.0
    %696 = vmatprep.subr.mxu0 0.0
    %697 = vmatpush2.xpose.msra.mxu0 0.0
    %698 = vmatprep.subr.mxu0 0.0
    %699 = vmatpush2.xpose.msra.mxu0 0.0
    %700 = vmatprep.subr.mxu0 0.0
    %701 = vmatpush2.xpose.msra.mxu0 0.0
    %702 = vmatprep.subr.mxu0 0.0
    %703 = vmatpush2.xpose.msra.mxu0 0.0
    %704 = vmatprep.subr.mxu0 0.0
    %705 = vmatpush2.xpose.msra.mxu0 0.0
    %706 = vmatprep.subr.mxu0 0.0
    %707 = vmatpush2.xpose.msra.mxu0 0.0
    %708 = vmatprep.subr.mxu0 0.0
    %709 = vmatpush2.xpose.msra.mxu0 0.0
    %710 = vmatprep.subr.mxu0 0.0
    %711 = vmatpush2.xpose.msra.mxu0 0.0
    %712 = vmatprep.subr.mxu0 0.0
    %713 = vmatpush2.xpose.msra.mxu0 0.0
    %714 = vmatprep.subr.mxu0 0.0
    %715 = vmatpush2.xpose.msra.mxu0 0.0
    %716 = vmatprep.subr.mxu0 0.0
    %717 = vmatpush2.xpose.msra.mxu0 0.0
    %718 = vmatprep.mubr.f32.mxu0 0.0
    %719 = vmatmul.mubr.f32.gmra.mxu0 %v650
    %v720 = vpop.f32.mrf.mxu0
    %v721 = vadd.f32 0.0, %v720
    %v722 = vpop.f32.mrf.mxu0
    %723 = vdwg.mxu0
    %v724 = vsel %vm393, %v643, -inf
    %725 = vmax.xlane.f32.xlu0 %v724
    %v726 = vpop.xlane.xlu0 %725
    %v727 = vsel %vm393, %v721, -inf
    %728 = vmax.xlane.f32.xlu0 %v727
    %v729 = vpop.xlane.xlu0 %728
    %v730 = vsub.f32 %v643, %v726
    %v731 = vsub.f32 %v721, %v729
    %v732 = vmul.f32 %v730, 1.442695
    %v733 = vpow.pop %v732
    %v734 = vmul.f32 %v731, 1.442695
    %v735 = vpow.pop %v734
    %v736 = vsel %vm393, %v733, 0.0
    %737 = vadd.xlane.f32.xlu0 %v736
    %v738 = vpop.xlane.xlu0 %737
    %v739 = vsel %vm393, %v735, 0.0
    %740 = vadd.xlane.f32.xlu0 %v739
    %v741 = vpop.xlane.xlu0 %740
    %v742 = vrcp.pop %v738
    %v743 = vmul.f32 %v733, %v742
    %v744 = vrcp.pop %v741
    %v745 = vmul.f32 %v735, %v744
    %747 = vrot.lane.b32.xlu0 %v385, 96
    %v748 = vpop.permute.xlu0 %747
    %v751 = vsel %vm393, %v743, 0
    %753 = vmatprep.subr.mxu0 0.0
    %754 = vmatpush1.msra.mxu0 0.0
    %755 = vmatprep.subr.mxu0 0.0
    %756 = vmatpush1.msra.mxu0 0.0
    %757 = vmatprep.subr.mxu0 0.0
    %758 = vmatpush1.msra.mxu0 0.0
    %759 = vmatprep.subr.mxu0 0.0
    %760 = vmatpush1.msra.mxu0 0.0
    %761 = vmatprep.subr.mxu0 0.0
    %762 = vmatpush1.msra.mxu0 0.0
    %763 = vmatprep.subr.mxu0 0.0
    %764 = vmatpush1.msra.mxu0 0.0
    %765 = vmatprep.subr.mxu0 0.0
    %766 = vmatpush1.msra.mxu0 0.0
    %767 = vmatprep.subr.mxu0 0.0
    %768 = vmatpush1.msra.mxu0 0.0
    %769 = vmatprep.subr.mxu0 0.0
    %770 = vmatpush1.msra.mxu0 0.0
    %771 = vmatprep.subr.mxu0 0.0
    %772 = vmatpush1.msra.mxu0 0.0
    %773 = vmatprep.subr.mxu0 0.0
    %774 = vmatpush1.msra.mxu0 0.0
    %775 = vmatprep.subr.mxu0 0.0
    %776 = vmatpush1.msra.mxu0 0.0
    %777 = vmatprep.subr.mxu0 0.0
    %778 = vmatpush1.msra.mxu0 0.0
    %779 = vmatprep.subr.mxu0 0.0
    %780 = vmatpush1.msra.mxu0 0.0
    %781 = vmatprep.subr.mxu0 0.0
    %782 = vmatpush1.msra.mxu0 0.0
    %783 = vmatprep.subr.mxu0 0.0
    %784 = vmatpush1.msra.mxu0 %v748
    %785 = vmatprep.subr.mxu0 0.0
    %786 = vmatpush2.msra.mxu0 0.0
    %787 = vmatprep.subr.mxu0 0.0
    %788 = vmatpush2.msra.mxu0 0.0
    %789 = vmatprep.subr.mxu0 0.0
    %790 = vmatpush2.msra.mxu0 0.0
    %791 = vmatprep.subr.mxu0 0.0
    %792 = vmatpush2.msra.mxu0 0.0
    %793 = vmatprep.subr.mxu0 0.0
    %794 = vmatpush2.msra.mxu0 0.0
    %795 = vmatprep.subr.mxu0 0.0
    %796 = vmatpush2.msra.mxu0 0.0
    %797 = vmatprep.subr.mxu0 0.0
    %798 = vmatpush2.msra.mxu0 0.0
    %799 = vmatprep.subr.mxu0 0.0
    %800 = vmatpush2.msra.mxu0 0.0
    %801 = vmatprep.subr.mxu0 0.0
    %802 = vmatpush2.msra.mxu0 0.0
    %803 = vmatprep.subr.mxu0 0.0
    %804 = vmatpush2.msra.mxu0 0.0
    %805 = vmatprep.subr.mxu0 0.0
    %806 = vmatpush2.msra.mxu0 0.0
    %807 = vmatprep.subr.mxu0 0.0
    %808 = vmatpush2.msra.mxu0 0.0
    %809 = vmatprep.subr.mxu0 0.0
    %810 = vmatpush2.msra.mxu0 0.0
    %811 = vmatprep.subr.mxu0 0.0
    %812 = vmatpush2.msra.mxu0 0.0
    %813 = vmatprep.subr.mxu0 0.0
    %814 = vmatpush2.msra.mxu0 0.0
    %815 = vmatprep.subr.mxu0 0.0
    %816 = vmatpush2.msra.mxu0 0.0
    %817 = vmatprep.mubr.f32.mxu0 0.0
    %818 = vmatmul.mubr.f32.gmra.mxu0 %v751
    %v819 = vpop.f32.mrf.mxu0
    %v820 = vadd.f32 0.0, %v819
    %v821 = vpop.f32.mrf.mxu0
    %822 = vdwg.mxu0
    %824 = vrot.lane.b32.xlu0 %v390, 96
    %v825 = vpop.permute.xlu0 %824
    %v828 = vsel %vm393, %v745, 0
    %830 = vmatprep.subr.mxu0 0.0
    %831 = vmatpush1.msra.mxu0 0.0
    %832 = vmatprep.subr.mxu0 0.0
    %833 = vmatpush1.msra.mxu0 0.0
    %834 = vmatprep.subr.mxu0 0.0
    %835 = vmatpush1.msra.mxu0 0.0
    %836 = vmatprep.subr.mxu0 0.0
    %837 = vmatpush1.msra.mxu0 0.0
    %838 = vmatprep.subr.mxu0 0.0
    %839 = vmatpush1.msra.mxu0 0.0
    %840 = vmatprep.subr.mxu0 0.0
    %841 = vmatpush1.msra.mxu0 0.0
    %842 = vmatprep.subr.mxu0 0.0
    %843 = vmatpush1.msra.mxu0 0.0
    %844 = vmatprep.subr.mxu0 0.0
    %845 = vmatpush1.msra.mxu0 0.0
    %846 = vmatprep.subr.mxu0 0.0
    %847 = vmatpush1.msra.mxu0 0.0
    %848 = vmatprep.subr.mxu0 0.0
    %849 = vmatpush1.msra.mxu0 0.0
    %850 = vmatprep.subr.mxu0 0.0
    %851 = vmatpush1.msra.mxu0 0.0
    %852 = vmatprep.subr.mxu0 0.0
    %853 = vmatpush1.msra.mxu0 0.0
    %854 = vmatprep.subr.mxu0 0.0
    %855 = vmatpush1.msra.mxu0 0.0
    %856 = vmatprep.subr.mxu0 0.0
    %857 = vmatpush1.msra.mxu0 0.0
    %858 = vmatprep.subr.mxu0 0.0
    %859 = vmatpush1.msra.mxu0 0.0
    %860 = vmatprep.subr.mxu0 0.0
    %861 = vmatpush1.msra.mxu0 %v825
    %862 = vmatprep.subr.mxu0 0.0
    %863 = vmatpush2.msra.mxu0 0.0
    %864 = vmatprep.subr.mxu0 0.0
    %865 = vmatpush2.msra.mxu0 0.0
    %866 = vmatprep.subr.mxu0 0.0
    %867 = vmatpush2.msra.mxu0 0.0
    %868 = vmatprep.subr.mxu0 0.0
    %869 = vmatpush2.msra.mxu0 0.0
    %870 = vmatprep.subr.mxu0 0.0
    %871 = vmatpush2.msra.mxu0 0.0
    %872 = vmatprep.subr.mxu0 0.0
    %873 = vmatpush2.msra.mxu0 0.0
    %874 = vmatprep.subr.mxu0 0.0
    %875 = vmatpush2.msra.mxu0 0.0
    %876 = vmatprep.subr.mxu0 0.0
    %877 = vmatpush2.msra.mxu0 0.0
    %878 = vmatprep.subr.mxu0 0.0
    %879 = vmatpush2.msra.mxu0 0.0
    %880 = vmatprep.subr.mxu0 0.0
    %881 = vmatpush2.msra.mxu0 0.0
    %882 = vmatprep.subr.mxu0 0.0
    %883 = vmatpush2.msra.mxu0 0.0
    %884 = vmatprep.subr.mxu0 0.0
    %885 = vmatpush2.msra.mxu0 0.0
    %886 = vmatprep.subr.mxu0 0.0
    %887 = vmatpush2.msra.mxu0 0.0
    %888 = vmatprep.subr.mxu0 0.0
    %889 = vmatpush2.msra.mxu0 0.0
    %890 = vmatprep.subr.mxu0 0.0
    %891 = vmatpush2.msra.mxu0 0.0
    %892 = vmatprep.subr.mxu0 0.0
    %893 = vmatpush2.msra.mxu0 0.0
    %894 = vmatprep.mubr.f32.mxu0 0.0
    %895 = vmatmul.mubr.f32.gmra.mxu0 %v828
    %v896 = vpop.f32.mrf.mxu0
    %v897 = vadd.f32 0.0, %v896
    %v898 = vpop.f32.mrf.mxu0
    %899 = vdwg.mxu0
    %v901 = vsel %vm393, %v565, 0
    %903 = vmatprep.subr.mxu0 0.0
    %904 = vmatpush1.msra.mxu0 0.0
    %905 = vmatprep.subr.mxu0 0.0
    %906 = vmatpush1.msra.mxu0 0.0
    %907 = vmatprep.subr.mxu0 0.0
    %908 = vmatpush1.msra.mxu0 0.0
    %909 = vmatprep.subr.mxu0 0.0
    %910 = vmatpush1.msra.mxu0 0.0
    %911 = vmatprep.subr.mxu0 0.0
    %912 = vmatpush1.msra.mxu0 0.0
    %913 = vmatprep.subr.mxu0 0.0
    %914 = vmatpush1.msra.mxu0 0.0
    %915 = vmatprep.subr.mxu0 0.0
    %916 = vmatpush1.msra.mxu0 0.0
    %917 = vmatprep.subr.mxu0 0.0
    %918 = vmatpush1.msra.mxu0 0.0
    %919 = vmatprep.subr.mxu0 0.0
    %920 = vmatpush1.msra.mxu0 0.0
    %921 = vmatprep.subr.mxu0 0.0
    %922 = vmatpush1.msra.mxu0 0.0
    %923 = vmatprep.subr.mxu0 0.0
    %924 = vmatpush1.msra.mxu0 0.0
    %925 = vmatprep.subr.mxu0 0.0
    %926 = vmatpush1.msra.mxu0 0.0
    %927 = vmatprep.subr.mxu0 0.0
    %928 = vmatpush1.msra.mxu0 0.0
    %929 = vmatprep.subr.mxu0 0.0
    %930 = vmatpush1.msra.mxu0 0.0
    %931 = vmatprep.subr.mxu0 0.0
    %932 = vmatpush1.msra.mxu0 0.0
    %933 = vmatprep.subr.mxu0 0.0
    %934 = vmatpush1.msra.mxu0 %v385
    %935 = vmatprep.subr.mxu0 0.0
    %936 = vmatpush2.msra.mxu0 0.0
    %937 = vmatprep.subr.mxu0 0.0
    %938 = vmatpush2.msra.mxu0 0.0
    %939 = vmatprep.subr.mxu0 0.0
    %940 = vmatpush2.msra.mxu0 0.0
    %941 = vmatprep.subr.mxu0 0.0
    %942 = vmatpush2.msra.mxu0 0.0
    %943 = vmatprep.subr.mxu0 0.0
    %944 = vmatpush2.msra.mxu0 0.0
    %945 = vmatprep.subr.mxu0 0.0
    %946 = vmatpush2.msra.mxu0 0.0
    %947 = vmatprep.subr.mxu0 0.0
    %948 = vmatpush2.msra.mxu0 0.0
    %949 = vmatprep.subr.mxu0 0.0
    %950 = vmatpush2.msra.mxu0 0.0
    %951 = vmatprep.subr.mxu0 0.0
    %952 = vmatpush2.msra.mxu0 0.0
    %953 = vmatprep.subr.mxu0 0.0
    %954 = vmatpush2.msra.mxu0 0.0
    %955 = vmatprep.subr.mxu0 0.0
    %956 = vmatpush2.msra.mxu0 0.0
    %957 = vmatprep.subr.mxu0 0.0
    %958 = vmatpush2.msra.mxu0 0.0
    %959 = vmatprep.subr.mxu0 0.0
    %960 = vmatpush2.msra.mxu0 0.0
    %961 = vmatprep.subr.mxu0 0.0
    %962 = vmatpush2.msra.mxu0 0.0
    %963 = vmatprep.subr.mxu0 0.0
    %964 = vmatpush2.msra.mxu0 0.0
    %965 = vmatprep.subr.mxu0 0.0
    %966 = vmatpush2.msra.mxu0 0.0
    %967 = vmatprep.mubr.f32.mxu0 0.0
    %968 = vmatmul.mubr.f32.gmra.mxu0 %v901
    %v969 = vpop.f32.mrf.mxu0
    %v970 = vadd.f32 %v820, %v969
    %v971 = vpop.f32.mrf.mxu0
    %972 = vdwg.mxu0
    %v974 = vsel %vm393, %v567, 0
    %976 = vmatprep.subr.mxu0 0.0
    %977 = vmatpush1.msra.mxu0 0.0
    %978 = vmatprep.subr.mxu0 0.0
    %979 = vmatpush1.msra.mxu0 0.0
    %980 = vmatprep.subr.mxu0 0.0
    %981 = vmatpush1.msra.mxu0 0.0
    %982 = vmatprep.subr.mxu0 0.0
    %983 = vmatpush1.msra.mxu0 0.0
    %984 = vmatprep.subr.mxu0 0.0
    %985 = vmatpush1.msra.mxu0 0.0
    %986 = vmatprep.subr.mxu0 0.0
    %987 = vmatpush1.msra.mxu0 0.0
    %988 = vmatprep.subr.mxu0 0.0
    %989 = vmatpush1.msra.mxu0 0.0
    %990 = vmatprep.subr.mxu0 0.0
    %991 = vmatpush1.msra.mxu0 0.0
    %992 = vmatprep.subr.mxu0 0.0
    %993 = vmatpush1.msra.mxu0 0.0
    %994 = vmatprep.subr.mxu0 0.0
    %995 = vmatpush1.msra.mxu0 0.0
    %996 = vmatprep.subr.mxu0 0.0
    %997 = vmatpush1.msra.mxu0 0.0
    %998 = vmatprep.subr.mxu0 0.0
    %999 = vmatpush1.msra.mxu0 0.0
    %1000 = vmatprep.subr.mxu0 0.0
    %1001 = vmatpush1.msra.mxu0 0.0
    %1002 = vmatprep.subr.mxu0 0.0
    %1003 = vmatpush1.msra.mxu0 0.0
    %1004 = vmatprep.subr.mxu0 0.0
    %1005 = vmatpush1.msra.mxu0 0.0
    %1006 = vmatprep.subr.mxu0 0.0
    %1007 = vmatpush1.msra.mxu0 %v390
    %1008 = vmatprep.subr.mxu0 0.0
    %1009 = vmatpush2.msra.mxu0 0.0
    %1010 = vmatprep.subr.mxu0 0.0
    %1011 = vmatpush2.msra.mxu0 0.0
    %1012 = vmatprep.subr.mxu0 0.0
    %1013 = vmatpush2.msra.mxu0 0.0
    %1014 = vmatprep.subr.mxu0 0.0
    %1015 = vmatpush2.msra.mxu0 0.0
    %1016 = vmatprep.subr.mxu0 0.0
    %1017 = vmatpush2.msra.mxu0 0.0
    %1018 = vmatprep.subr.mxu0 0.0
    %1019 = vmatpush2.msra.mxu0 0.0
    %1020 = vmatprep.subr.mxu0 0.0
    %1021 = vmatpush2.msra.mxu0 0.0
    %1022 = vmatprep.subr.mxu0 0.0
    %1023 = vmatpush2.msra.mxu0 0.0
    %1024 = vmatprep.subr.mxu0 0.0
    %1025 = vmatpush2.msra.mxu0 0.0
    %1026 = vmatprep.subr.mxu0 0.0
    %1027 = vmatpush2.msra.mxu0 0.0
    %1028 = vmatprep.subr.mxu0 0.0
    %1029 = vmatpush2.msra.mxu0 0.0
    %1030 = vmatprep.subr.mxu0 0.0
    %1031 = vmatpush2.msra.mxu0 0.0
    %1032 = vmatprep.subr.mxu0 0.0
    %1033 = vmatpush2.msra.mxu0 0.0
    %1034 = vmatprep.subr.mxu0 0.0
    %1035 = vmatpush2.msra.mxu0 0.0
    %1036 = vmatprep.subr.mxu0 0.0
    %1037 = vmatpush2.msra.mxu0 0.0
    %1038 = vmatprep.subr.mxu0 0.0
    %1039 = vmatpush2.msra.mxu0 0.0
    %1040 = vmatprep.mubr.f32.mxu0 0.0
    %1041 = vmatmul.mubr.f32.gmra.mxu0 %v974
    %v1042 = vpop.f32.mrf.mxu0
    %v1043 = vadd.f32 %v897, %v1042
    %v1044 = vpop.f32.mrf.mxu0
    %1045 = vdwg.mxu0
    %1046 = vrot.lane.b32.xlu0 %v204, 112
    %v1047 = vpop.permute.xlu0 %1046
    %1048 = vrot.lane.b32.xlu0 %v298, 112
    %v1049 = vpop.permute.xlu0 %1048
    %v1050 = vsel %vm393, %v1047, 0
    %v1052 = vsel %vm393, %v1049, 0
    %1054 = vmatprep.subr.mxu0 0.0
    %1055 = vmatpush1.xpose.msra.mxu0 0.0
    %1056 = vmatprep.subr.mxu0 0.0
    %1057 = vmatpush1.xpose.msra.mxu0 0.0
    %1058 = vmatprep.subr.mxu0 0.0
    %1059 = vmatpush1.xpose.msra.mxu0 0.0
    %1060 = vmatprep.subr.mxu0 0.0
    %1061 = vmatpush1.xpose.msra.mxu0 0.0
    %1062 = vmatprep.subr.mxu0 0.0
    %1063 = vmatpush1.xpose.msra.mxu0 0.0
    %1064 = vmatprep.subr.mxu0 0.0
    %1065 = vmatpush1.xpose.msra.mxu0 0.0
    %1066 = vmatprep.subr.mxu0 0.0
    %1067 = vmatpush1.xpose.msra.mxu0 0.0
    %1068 = vmatprep.subr.mxu0 0.0
    %1069 = vmatpush1.xpose.msra.mxu0 0.0
    %1070 = vmatprep.subr.mxu0 0.0
    %1071 = vmatpush1.xpose.msra.mxu0 0.0
    %1072 = vmatprep.subr.mxu0 0.0
    %1073 = vmatpush1.xpose.msra.mxu0 0.0
    %1074 = vmatprep.subr.mxu0 0.0
    %1075 = vmatpush1.xpose.msra.mxu0 0.0
    %1076 = vmatprep.subr.mxu0 0.0
    %1077 = vmatpush1.xpose.msra.mxu0 0.0
    %1078 = vmatprep.subr.mxu0 0.0
    %1079 = vmatpush1.xpose.msra.mxu0 0.0
    %1080 = vmatprep.subr.mxu0 0.0
    %1081 = vmatpush1.xpose.msra.mxu0 0.0
    %1082 = vmatprep.subr.mxu0 0.0
    %1083 = vmatpush1.xpose.msra.mxu0 0.0
    %1084 = vmatprep.subr.mxu0 0.0
    %1085 = vmatpush1.xpose.msra.mxu0 %v1052
    %1086 = vmatprep.subr.mxu0 0.0
    %1087 = vmatpush2.xpose.msra.mxu0 0.0
    %1088 = vmatprep.subr.mxu0 0.0
    %1089 = vmatpush2.xpose.msra.mxu0 0.0
    %1090 = vmatprep.subr.mxu0 0.0
    %1091 = vmatpush2.xpose.msra.mxu0 0.0
    %1092 = vmatprep.subr.mxu0 0.0
    %1093 = vmatpush2.xpose.msra.mxu0 0.0
    %1094 = vmatprep.subr.mxu0 0.0
    %1095 = vmatpush2.xpose.msra.mxu0 0.0
    %1096 = vmatprep.subr.mxu0 0.0
    %1097 = vmatpush2.xpose.msra.mxu0 0.0
    %1098 = vmatprep.subr.mxu0 0.0
    %1099 = vmatpush2.xpose.msra.mxu0 0.0
    %1100 = vmatprep.subr.mxu0 0.0
    %1101 = vmatpush2.xpose.msra.mxu0 0.0
    %1102 = vmatprep.subr.mxu0 0.0
    %1103 = vmatpush2.xpose.msra.mxu0 0.0
    %1104 = vmatprep.subr.mxu0 0.0
    %1105 = vmatpush2.xpose.msra.mxu0 0.0
    %1106 = vmatprep.subr.mxu0 0.0
    %1107 = vmatpush2.xpose.msra.mxu0 0.0
    %1108 = vmatprep.subr.mxu0 0.0
    %1109 = vmatpush2.xpose.msra.mxu0 0.0
    %1110 = vmatprep.subr.mxu0 0.0
    %1111 = vmatpush2.xpose.msra.mxu0 0.0
    %1112 = vmatprep.subr.mxu0 0.0
    %1113 = vmatpush2.xpose.msra.mxu0 0.0
    %1114 = vmatprep.subr.mxu0 0.0
    %1115 = vmatpush2.xpose.msra.mxu0 0.0
    %1116 = vmatprep.subr.mxu0 0.0
    %1117 = vmatpush2.xpose.msra.mxu0 0.0
    %1118 = vmatprep.mubr.f32.mxu0 0.0
    %1119 = vmatmul.mubr.f32.gmra.mxu0 %v1050
    %v1120 = vpop.f32.mrf.mxu0
    %v1121 = vadd.f32 0.0, %v1120
    %v1122 = vpop.f32.mrf.mxu0
    %1123 = vdwg.mxu0
    %1124 = vrot.lane.b32.xlu0 %v209, 112
    %v1125 = vpop.permute.xlu0 %1124
    %1126 = vrot.lane.b32.xlu0 %v303, 112
    %v1127 = vpop.permute.xlu0 %1126
    %v1128 = vsel %vm393, %v1125, 0
    %v1130 = vsel %vm393, %v1127, 0
    %1132 = vmatprep.subr.mxu0 0.0
    %1133 = vmatpush1.xpose.msra.mxu0 0.0
    %1134 = vmatprep.subr.mxu0 0.0
    %1135 = vmatpush1.xpose.msra.mxu0 0.0
    %1136 = vmatprep.subr.mxu0 0.0
    %1137 = vmatpush1.xpose.msra.mxu0 0.0
    %1138 = vmatprep.subr.mxu0 0.0
    %1139 = vmatpush1.xpose.msra.mxu0 0.0
    %1140 = vmatprep.subr.mxu0 0.0
    %1141 = vmatpush1.xpose.msra.mxu0 0.0
    %1142 = vmatprep.subr.mxu0 0.0
    %1143 = vmatpush1.xpose.msra.mxu0 0.0
    %1144 = vmatprep.subr.mxu0 0.0
    %1145 = vmatpush1.xpose.msra.mxu0 0.0
    %1146 = vmatprep.subr.mxu0 0.0
    %1147 = vmatpush1.xpose.msra.mxu0 0.0
    %1148 = vmatprep.subr.mxu0 0.0
    %1149 = vmatpush1.xpose.msra.mxu0 0.0
    %1150 = vmatprep.subr.mxu0 0.0
    %1151 = vmatpush1.xpose.msra.mxu0 0.0
    %1152 = vmatprep.subr.mxu0 0.0
    %1153 = vmatpush1.xpose.msra.mxu0 0.0
    %1154 = vmatprep.subr.mxu0 0.0
    %1155 = vmatpush1.xpose.msra.mxu0 0.0
    %1156 = vmatprep.subr.mxu0 0.0
    %1157 = vmatpush1.xpose.msra.mxu0 0.0
    %1158 = vmatprep.subr.mxu0 0.0
    %1159 = vmatpush1.xpose.msra.mxu0 0.0
    %1160 = vmatprep.subr.mxu0 0.0
    %1161 = vmatpush1.xpose.msra.mxu0 0.0
    %1162 = vmatprep.subr.mxu0 0.0
    %1163 = vmatpush1.xpose.msra.mxu0 %v1130
    %1164 = vmatprep.subr.mxu0 0.0
    %1165 = vmatpush2.xpose.msra.mxu0 0.0
    %1166 = vmatprep.subr.mxu0 0.0
    %1167 = vmatpush2.xpose.msra.mxu0 0.0
    %1168 = vmatprep.subr.mxu0 0.0
    %1169 = vmatpush2.xpose.msra.mxu0 0.0
    %1170 = vmatprep.subr.mxu0 0.0
    %1171 = vmatpush2.xpose.msra.mxu0 0.0
    %1172 = vmatprep.subr.mxu0 0.0
    %1173 = vmatpush2.xpose.msra.mxu0 0.0
    %1174 = vmatprep.subr.mxu0 0.0
    %1175 = vmatpush2.xpose.msra.mxu0 0.0
    %1176 = vmatprep.subr.mxu0 0.0
    %1177 = vmatpush2.xpose.msra.mxu0 0.0
    %1178 = vmatprep.subr.mxu0 0.0
    %1179 = vmatpush2.xpose.msra.mxu0 0.0
    %1180 = vmatprep.subr.mxu0 0.0
    %1181 = vmatpush2.xpose.msra.mxu0 0.0
    %1182 = vmatprep.subr.mxu0 0.0
    %1183 = vmatpush2.xpose.msra.mxu0 0.0
    %1184 = vmatprep.subr.mxu0 0.0
    %1185 = vmatpush2.xpose.msra.mxu0 0.0
    %1186 = vmatprep.subr.mxu0 0.0
    %1187 = vmatpush2.xpose.msra.mxu0 0.0
    %1188 = vmatprep.subr.mxu0 0.0
    %1189 = vmatpush2.xpose.msra.mxu0 0.0
    %1190 = vmatprep.subr.mxu0 0.0
    %1191 = vmatpush2.xpose.msra.mxu0 0.0
    %1192 = vmatprep.subr.mxu0 0.0
    %1193 = vmatpush2.xpose.msra.mxu0 0.0
    %1194 = vmatprep.subr.mxu0 0.0
    %1195 = vmatpush2.xpose.msra.mxu0 0.0
    %1196 = vmatprep.mubr.f32.mxu0 0.0
    %1197 = vmatmul.mubr.f32.gmra.mxu0 %v1128
    %v1198 = vpop.f32.mrf.mxu0
    %v1199 = vadd.f32 0.0, %v1198
    %v1200 = vpop.f32.mrf.mxu0
    %1201 = vdwg.mxu0
    %v1202 = vsel %vm393, %v1121, -inf
    %1203 = vmax.xlane.f32.xlu0 %v1202
    %v1204 = vpop.xlane.xlu0 %1203
    %v1205 = vsel %vm393, %v1199, -inf
    %1206 = vmax.xlane.f32.xlu0 %v1205
    %v1207 = vpop.xlane.xlu0 %1206
    %v1208 = vsub.f32 %v1121, %v1204
    %v1209 = vsub.f32 %v1199, %v1207
    %v1210 = vmul.f32 %v1208, 1.442695
    %v1211 = vpow.pop %v1210
    %v1212 = vmul.f32 %v1209, 1.442695
    %v1213 = vpow.pop %v1212
    %v1214 = vsel %vm393, %v1211, 0.0
    %1215 = vadd.xlane.f32.xlu0 %v1214
    %v1216 = vpop.xlane.xlu0 %1215
    %v1217 = vsel %vm393, %v1213, 0.0
    %1218 = vadd.xlane.f32.xlu0 %v1217
    %v1219 = vpop.xlane.xlu0 %1218
    %v1220 = vrcp.pop %v1216
    %v1221 = vmul.f32 %v1211, %v1220
    %v1222 = vrcp.pop %v1219
    %v1223 = vmul.f32 %v1213, %v1222
    %1224 = vrot.lane.b32.xlu0 %v385, 64
    %v1225 = vpop.permute.xlu0 %1224
    %v1228 = vsel %vm393, %v1221, 0
    %1230 = vmatprep.subr.mxu0 0.0
    %1231 = vmatpush1.msra.mxu0 0.0
    %1232 = vmatprep.subr.mxu0 0.0
    %1233 = vmatpush1.msra.mxu0 0.0
    %1234 = vmatprep.subr.mxu0 0.0
    %1235 = vmatpush1.msra.mxu0 0.0
    %1236 = vmatprep.subr.mxu0 0.0
    %1237 = vmatpush1.msra.mxu0 0.0
    %1238 = vmatprep.subr.mxu0 0.0
    %1239 = vmatpush1.msra.mxu0 0.0
    %1240 = vmatprep.subr.mxu0 0.0
    %1241 = vmatpush1.msra.mxu0 0.0
    %1242 = vmatprep.subr.mxu0 0.0
    %1243 = vmatpush1.msra.mxu0 0.0
    %1244 = vmatprep.subr.mxu0 0.0
    %1245 = vmatpush1.msra.mxu0 0.0
    %1246 = vmatprep.subr.mxu0 0.0
    %1247 = vmatpush1.msra.mxu0 0.0
    %1248 = vmatprep.subr.mxu0 0.0
    %1249 = vmatpush1.msra.mxu0 0.0
    %1250 = vmatprep.subr.mxu0 0.0
    %1251 = vmatpush1.msra.mxu0 0.0
    %1252 = vmatprep.subr.mxu0 0.0
    %1253 = vmatpush1.msra.mxu0 0.0
    %1254 = vmatprep.subr.mxu0 0.0
    %1255 = vmatpush1.msra.mxu0 0.0
    %1256 = vmatprep.subr.mxu0 0.0
    %1257 = vmatpush1.msra.mxu0 0.0
    %1258 = vmatprep.subr.mxu0 0.0
    %1259 = vmatpush1.msra.mxu0 0.0
    %1260 = vmatprep.subr.mxu0 0.0
    %1261 = vmatpush1.msra.mxu0 %v1225
    %1262 = vmatprep.subr.mxu0 0.0
    %1263 = vmatpush2.msra.mxu0 0.0
    %1264 = vmatprep.subr.mxu0 0.0
    %1265 = vmatpush2.msra.mxu0 0.0
    %1266 = vmatprep.subr.mxu0 0.0
    %1267 = vmatpush2.msra.mxu0 0.0
    %1268 = vmatprep.subr.mxu0 0.0
    %1269 = vmatpush2.msra.mxu0 0.0
    %1270 = vmatprep.subr.mxu0 0.0
    %1271 = vmatpush2.msra.mxu0 0.0
    %1272 = vmatprep.subr.mxu0 0.0
    %1273 = vmatpush2.msra.mxu0 0.0
    %1274 = vmatprep.subr.mxu0 0.0
    %1275 = vmatpush2.msra.mxu0 0.0
    %1276 = vmatprep.subr.mxu0 0.0
    %1277 = vmatpush2.msra.mxu0 0.0
    %1278 = vmatprep.subr.mxu0 0.0
    %1279 = vmatpush2.msra.mxu0 0.0
    %1280 = vmatprep.subr.mxu0 0.0
    %1281 = vmatpush2.msra.mxu0 0.0
    %1282 = vmatprep.subr.mxu0 0.0
    %1283 = vmatpush2.msra.mxu0 0.0
    %1284 = vmatprep.subr.mxu0 0.0
    %1285 = vmatpush2.msra.mxu0 0.0
    %1286 = vmatprep.subr.mxu0 0.0
    %1287 = vmatpush2.msra.mxu0 0.0
    %1288 = vmatprep.subr.mxu0 0.0
    %1289 = vmatpush2.msra.mxu0 0.0
    %1290 = vmatprep.subr.mxu0 0.0
    %1291 = vmatpush2.msra.mxu0 0.0
    %1292 = vmatprep.subr.mxu0 0.0
    %1293 = vmatpush2.msra.mxu0 0.0
    %1294 = vmatprep.mubr.f32.mxu0 0.0
    %1295 = vmatmul.mubr.f32.gmra.mxu0 %v1228
    %v1296 = vpop.f32.mrf.mxu0
    %v1297 = vadd.f32 0.0, %v1296
    %v1298 = vpop.f32.mrf.mxu0
    %1299 = vdwg.mxu0
    %1300 = vrot.lane.b32.xlu0 %v390, 64
    %v1301 = vpop.permute.xlu0 %1300
    %v1304 = vsel %vm393, %v1223, 0
    %1306 = vmatprep.subr.mxu0 0.0
    %1307 = vmatpush1.msra.mxu0 0.0
    %1308 = vmatprep.subr.mxu0 0.0
    %1309 = vmatpush1.msra.mxu0 0.0
    %1310 = vmatprep.subr.mxu0 0.0
    %1311 = vmatpush1.msra.mxu0 0.0
    %1312 = vmatprep.subr.mxu0 0.0
    %1313 = vmatpush1.msra.mxu0 0.0
    %1314 = vmatprep.subr.mxu0 0.0
    %1315 = vmatpush1.msra.mxu0 0.0
    %1316 = vmatprep.subr.mxu0 0.0
    %1317 = vmatpush1.msra.mxu0 0.0
    %1318 = vmatprep.subr.mxu0 0.0
    %1319 = vmatpush1.msra.mxu0 0.0
    %1320 = vmatprep.subr.mxu0 0.0
    %1321 = vmatpush1.msra.mxu0 0.0
    %1322 = vmatprep.subr.mxu0 0.0
    %1323 = vmatpush1.msra.mxu0 0.0
    %1324 = vmatprep.subr.mxu0 0.0
    %1325 = vmatpush1.msra.mxu0 0.0
    %1326 = vmatprep.subr.mxu0 0.0
    %1327 = vmatpush1.msra.mxu0 0.0
    %1328 = vmatprep.subr.mxu0 0.0
    %1329 = vmatpush1.msra.mxu0 0.0
    %1330 = vmatprep.subr.mxu0 0.0
    %1331 = vmatpush1.msra.mxu0 0.0
    %1332 = vmatprep.subr.mxu0 0.0
    %1333 = vmatpush1.msra.mxu0 0.0
    %1334 = vmatprep.subr.mxu0 0.0
    %1335 = vmatpush1.msra.mxu0 0.0
    %1336 = vmatprep.subr.mxu0 0.0
    %1337 = vmatpush1.msra.mxu0 %v1301
    %1338 = vmatprep.subr.mxu0 0.0
    %1339 = vmatpush2.msra.mxu0 0.0
    %1340 = vmatprep.subr.mxu0 0.0
    %1341 = vmatpush2.msra.mxu0 0.0
    %1342 = vmatprep.subr.mxu0 0.0
    %1343 = vmatpush2.msra.mxu0 0.0
    %1344 = vmatprep.subr.mxu0 0.0
    %1345 = vmatpush2.msra.mxu0 0.0
    %1346 = vmatprep.subr.mxu0 0.0
    %1347 = vmatpush2.msra.mxu0 0.0
    %1348 = vmatprep.subr.mxu0 0.0
    %1349 = vmatpush2.msra.mxu0 0.0
    %1350 = vmatprep.subr.mxu0 0.0
    %1351 = vmatpush2.msra.mxu0 0.0
    %1352 = vmatprep.subr.mxu0 0.0
    %1353 = vmatpush2.msra.mxu0 0.0
    %1354 = vmatprep.subr.mxu0 0.0
    %1355 = vmatpush2.msra.mxu0 0.0
    %1356 = vmatprep.subr.mxu0 0.0
    %1357 = vmatpush2.msra.mxu0 0.0
    %1358 = vmatprep.subr.mxu0 0.0
    %1359 = vmatpush2.msra.mxu0 0.0
    %1360 = vmatprep.subr.mxu0 0.0
    %1361 = vmatpush2.msra.mxu0 0.0
    %1362 = vmatprep.subr.mxu0 0.0
    %1363 = vmatpush2.msra.mxu0 0.0
    %1364 = vmatprep.subr.mxu0 0.0
    %1365 = vmatpush2.msra.mxu0 0.0
    %1366 = vmatprep.subr.mxu0 0.0
    %1367 = vmatpush2.msra.mxu0 0.0
    %1368 = vmatprep.subr.mxu0 0.0
    %1369 = vmatpush2.msra.mxu0 0.0
    %1370 = vmatprep.mubr.f32.mxu0 0.0
    %1371 = vmatmul.mubr.f32.gmra.mxu0 %v1304
    %v1372 = vpop.f32.mrf.mxu0
    %v1373 = vadd.f32 0.0, %v1372
    %v1374 = vpop.f32.mrf.mxu0
    %1375 = vdwg.mxu0
    %v1376 = vadd.f32 %v970, %v1297
    %v1377 = vadd.f32 %v1043, %v1373
    %1378 = vrot.lane.b32.xlu0 %v204, 104
    %v1379 = vpop.permute.xlu0 %1378
    %1380 = vrot.lane.b32.xlu0 %v298, 104
    %v1381 = vpop.permute.xlu0 %1380
    %v1382 = vsel %vm393, %v1379, 0
    %v1384 = vsel %vm393, %v1381, 0
    %1386 = vmatprep.subr.mxu0 0.0
    %1387 = vmatpush1.xpose.msra.mxu0 0.0
    %1388 = vmatprep.subr.mxu0 0.0
    %1389 = vmatpush1.xpose.msra.mxu0 0.0
    %1390 = vmatprep.subr.mxu0 0.0
    %1391 = vmatpush1.xpose.msra.mxu0 0.0
    %1392 = vmatprep.subr.mxu0 0.0
    %1393 = vmatpush1.xpose.msra.mxu0 0.0
    %1394 = vmatprep.subr.mxu0 0.0
    %1395 = vmatpush1.xpose.msra.mxu0 0.0
    %1396 = vmatprep.subr.mxu0 0.0
    %1397 = vmatpush1.xpose.msra.mxu0 0.0
    %1398 = vmatprep.subr.mxu0 0.0
    %1399 = vmatpush1.xpose.msra.mxu0 0.0
    %1400 = vmatprep.subr.mxu0 0.0
    %1401 = vmatpush1.xpose.msra.mxu0 0.0
    %1402 = vmatprep.subr.mxu0 0.0
    %1403 = vmatpush1.xpose.msra.mxu0 0.0
    %1404 = vmatprep.subr.mxu0 0.0
    %1405 = vmatpush1.xpose.msra.mxu0 0.0
    %1406 = vmatprep.subr.mxu0 0.0
    %1407 = vmatpush1.xpose.msra.mxu0 0.0
    %1408 = vmatprep.subr.mxu0 0.0
    %1409 = vmatpush1.xpose.msra.mxu0 0.0
    %1410 = vmatprep.subr.mxu0 0.0
    %1411 = vmatpush1.xpose.msra.mxu0 0.0
    %1412 = vmatprep.subr.mxu0 0.0
    %1413 = vmatpush1.xpose.msra.mxu0 0.0
    %1414 = vmatprep.subr.mxu0 0.0
    %1415 = vmatpush1.xpose.msra.mxu0 0.0
    %1416 = vmatprep.subr.mxu0 0.0
    %1417 = vmatpush1.xpose.msra.mxu0 %v1384
    %1418 = vmatprep.subr.mxu0 0.0
    %1419 = vmatpush2.xpose.msra.mxu0 0.0
    %1420 = vmatprep.subr.mxu0 0.0
    %1421 = vmatpush2.xpose.msra.mxu0 0.0
    %1422 = vmatprep.subr.mxu0 0.0
    %1423 = vmatpush2.xpose.msra.mxu0 0.0
    %1424 = vmatprep.subr.mxu0 0.0
    %1425 = vmatpush2.xpose.msra.mxu0 0.0
    %1426 = vmatprep.subr.mxu0 0.0
    %1427 = vmatpush2.xpose.msra.mxu0 0.0
    %1428 = vmatprep.subr.mxu0 0.0
    %1429 = vmatpush2.xpose.msra.mxu0 0.0
    %1430 = vmatprep.subr.mxu0 0.0
    %1431 = vmatpush2.xpose.msra.mxu0 0.0
    %1432 = vmatprep.subr.mxu0 0.0
    %1433 = vmatpush2.xpose.msra.mxu0 0.0
    %1434 = vmatprep.subr.mxu0 0.0
    %1435 = vmatpush2.xpose.msra.mxu0 0.0
    %1436 = vmatprep.subr.mxu0 0.0
    %1437 = vmatpush2.xpose.msra.mxu0 0.0
    %1438 = vmatprep.subr.mxu0 0.0
    %1439 = vmatpush2.xpose.msra.mxu0 0.0
    %1440 = vmatprep.subr.mxu0 0.0
    %1441 = vmatpush2.xpose.msra.mxu0 0.0
    %1442 = vmatprep.subr.mxu0 0.0
    %1443 = vmatpush2.xpose.msra.mxu0 0.0
    %1444 = vmatprep.subr.mxu0 0.0
    %1445 = vmatpush2.xpose.msra.mxu0 0.0
    %1446 = vmatprep.subr.mxu0 0.0
    %1447 = vmatpush2.xpose.msra.mxu0 0.0
    %1448 = vmatprep.subr.mxu0 0.0
    %1449 = vmatpush2.xpose.msra.mxu0 0.0
    %1450 = vmatprep.mubr.f32.mxu0 0.0
    %1451 = vmatmul.mubr.f32.gmra.mxu0 %v1382
    %v1452 = vpop.f32.mrf.mxu0
    %v1453 = vadd.f32 0.0, %v1452
    %v1454 = vpop.f32.mrf.mxu0
    %1455 = vdwg.mxu0
    %1456 = vrot.lane.b32.xlu0 %v209, 104
    %v1457 = vpop.permute.xlu0 %1456
    %1458 = vrot.lane.b32.xlu0 %v303, 104
    %v1459 = vpop.permute.xlu0 %1458
    %v1460 = vsel %vm393, %v1457, 0
    %v1462 = vsel %vm393, %v1459, 0
    %1464 = vmatprep.subr.mxu0 0.0
    %1465 = vmatpush1.xpose.msra.mxu0 0.0
    %1466 = vmatprep.subr.mxu0 0.0
    %1467 = vmatpush1.xpose.msra.mxu0 0.0
    %1468 = vmatprep.subr.mxu0 0.0
    %1469 = vmatpush1.xpose.msra.mxu0 0.0
    %1470 = vmatprep.subr.mxu0 0.0
    %1471 = vmatpush1.xpose.msra.mxu0 0.0
    %1472 = vmatprep.subr.mxu0 0.0
    %1473 = vmatpush1.xpose.msra.mxu0 0.0
    %1474 = vmatprep.subr.mxu0 0.0
    %1475 = vmatpush1.xpose.msra.mxu0 0.0
    %1476 = vmatprep.subr.mxu0 0.0
    %1477 = vmatpush1.xpose.msra.mxu0 0.0
    %1478 = vmatprep.subr.mxu0 0.0
    %1479 = vmatpush1.xpose.msra.mxu0 0.0
    %1480 = vmatprep.subr.mxu0 0.0
    %1481 = vmatpush1.xpose.msra.mxu0 0.0
    %1482 = vmatprep.subr.mxu0 0.0
    %1483 = vmatpush1.xpose.msra.mxu0 0.0
    %1484 = vmatprep.subr.mxu0 0.0
    %1485 = vmatpush1.xpose.msra.mxu0 0.0
    %1486 = vmatprep.subr.mxu0 0.0
    %1487 = vmatpush1.xpose.msra.mxu0 0.0
    %1488 = vmatprep.subr.mxu0 0.0
    %1489 = vmatpush1.xpose.msra.mxu0 0.0
    %1490 = vmatprep.subr.mxu0 0.0
    %1491 = vmatpush1.xpose.msra.mxu0 0.0
    %1492 = vmatprep.subr.mxu0 0.0
    %1493 = vmatpush1.xpose.msra.mxu0 0.0
    %1494 = vmatprep.subr.mxu0 0.0
    %1495 = vmatpush1.xpose.msra.mxu0 %v1462
    %1496 = vmatprep.subr.mxu0 0.0
    %1497 = vmatpush2.xpose.msra.mxu0 0.0
    %1498 = vmatprep.subr.mxu0 0.0
    %1499 = vmatpush2.xpose.msra.mxu0 0.0
    %1500 = vmatprep.subr.mxu0 0.0
    %1501 = vmatpush2.xpose.msra.mxu0 0.0
    %1502 = vmatprep.subr.mxu0 0.0
    %1503 = vmatpush2.xpose.msra.mxu0 0.0
    %1504 = vmatprep.subr.mxu0 0.0
    %1505 = vmatpush2.xpose.msra.mxu0 0.0
    %1506 = vmatprep.subr.mxu0 0.0
    %1507 = vmatpush2.xpose.msra.mxu0 0.0
    %1508 = vmatprep.subr.mxu0 0.0
    %1509 = vmatpush2.xpose.msra.mxu0 0.0
    %1510 = vmatprep.subr.mxu0 0.0
    %1511 = vmatpush2.xpose.msra.mxu0 0.0
    %1512 = vmatprep.subr.mxu0 0.0
    %1513 = vmatpush2.xpose.msra.mxu0 0.0
    %1514 = vmatprep.subr.mxu0 0.0
    %1515 = vmatpush2.xpose.msra.mxu0 0.0
    %1516 = vmatprep.subr.mxu0 0.0
    %1517 = vmatpush2.xpose.msra.mxu0 0.0
    %1518 = vmatprep.subr.mxu0 0.0
    %1519 = vmatpush2.xpose.msra.mxu0 0.0
    %1520 = vmatprep.subr.mxu0 0.0
    %1521 = vmatpush2.xpose.msra.mxu0 0.0
    %1522 = vmatprep.subr.mxu0 0.0
    %1523 = vmatpush2.xpose.msra.mxu0 0.0
    %1524 = vmatprep.subr.mxu0 0.0
    %1525 = vmatpush2.xpose.msra.mxu0 0.0
    %1526 = vmatprep.subr.mxu0 0.0
    %1527 = vmatpush2.xpose.msra.mxu0 0.0
    %1528 = vmatprep.mubr.f32.mxu0 0.0
    %1529 = vmatmul.mubr.f32.gmra.mxu0 %v1460
    %v1530 = vpop.f32.mrf.mxu0
    %v1531 = vadd.f32 0.0, %v1530
    %v1532 = vpop.f32.mrf.mxu0
    %1533 = vdwg.mxu0
    %v1534 = vsel %vm393, %v1453, -inf
    %1535 = vmax.xlane.f32.xlu0 %v1534
    %v1536 = vpop.xlane.xlu0 %1535
    %v1537 = vsel %vm393, %v1531, -inf
    %1538 = vmax.xlane.f32.xlu0 %v1537
    %v1539 = vpop.xlane.xlu0 %1538
    %v1540 = vsub.f32 %v1453, %v1536
    %v1541 = vsub.f32 %v1531, %v1539
    %v1542 = vmul.f32 %v1540, 1.442695
    %v1543 = vpow.pop %v1542
    %v1544 = vmul.f32 %v1541, 1.442695
    %v1545 = vpow.pop %v1544
    %v1546 = vsel %vm393, %v1543, 0.0
    %1547 = vadd.xlane.f32.xlu0 %v1546
    %v1548 = vpop.xlane.xlu0 %1547
    %v1549 = vsel %vm393, %v1545, 0.0
    %1550 = vadd.xlane.f32.xlu0 %v1549
    %v1551 = vpop.xlane.xlu0 %1550
    %v1552 = vrcp.pop %v1548
    %v1553 = vmul.f32 %v1543, %v1552
    %v1554 = vrcp.pop %v1551
    %v1555 = vmul.f32 %v1545, %v1554
    %1556 = vrot.lane.b32.xlu0 %v385, 32
    %v1557 = vpop.permute.xlu0 %1556
    %v1560 = vsel %vm393, %v1553, 0
    %1562 = vmatprep.subr.mxu0 0.0
    %1563 = vmatpush1.msra.mxu0 0.0
    %1564 = vmatprep.subr.mxu0 0.0
    %1565 = vmatpush1.msra.mxu0 0.0
    %1566 = vmatprep.subr.mxu0 0.0
    %1567 = vmatpush1.msra.mxu0 0.0
    %1568 = vmatprep.subr.mxu0 0.0
    %1569 = vmatpush1.msra.mxu0 0.0
    %1570 = vmatprep.subr.mxu0 0.0
    %1571 = vmatpush1.msra.mxu0 0.0
    %1572 = vmatprep.subr.mxu0 0.0
    %1573 = vmatpush1.msra.mxu0 0.0
    %1574 = vmatprep.subr.mxu0 0.0
    %1575 = vmatpush1.msra.mxu0 0.0
    %1576 = vmatprep.subr.mxu0 0.0
    %1577 = vmatpush1.msra.mxu0 0.0
    %1578 = vmatprep.subr.mxu0 0.0
    %1579 = vmatpush1.msra.mxu0 0.0
    %1580 = vmatprep.subr.mxu0 0.0
    %1581 = vmatpush1.msra.mxu0 0.0
    %1582 = vmatprep.subr.mxu0 0.0
    %1583 = vmatpush1.msra.mxu0 0.0
    %1584 = vmatprep.subr.mxu0 0.0
    %1585 = vmatpush1.msra.mxu0 0.0
    %1586 = vmatprep.subr.mxu0 0.0
    %1587 = vmatpush1.msra.mxu0 0.0
    %1588 = vmatprep.subr.mxu0 0.0
    %1589 = vmatpush1.msra.mxu0 0.0
    %1590 = vmatprep.subr.mxu0 0.0
    %1591 = vmatpush1.msra.mxu0 0.0
    %1592 = vmatprep.subr.mxu0 0.0
    %1593 = vmatpush1.msra.mxu0 %v1557
    %1594 = vmatprep.subr.mxu0 0.0
    %1595 = vmatpush2.msra.mxu0 0.0
    %1596 = vmatprep.subr.mxu0 0.0
    %1597 = vmatpush2.msra.mxu0 0.0
    %1598 = vmatprep.subr.mxu0 0.0
    %1599 = vmatpush2.msra.mxu0 0.0
    %1600 = vmatprep.subr.mxu0 0.0
    %1601 = vmatpush2.msra.mxu0 0.0
    %1602 = vmatprep.subr.mxu0 0.0
    %1603 = vmatpush2.msra.mxu0 0.0
    %1604 = vmatprep.subr.mxu0 0.0
    %1605 = vmatpush2.msra.mxu0 0.0
    %1606 = vmatprep.subr.mxu0 0.0
    %1607 = vmatpush2.msra.mxu0 0.0
    %1608 = vmatprep.subr.mxu0 0.0
    %1609 = vmatpush2.msra.mxu0 0.0
    %1610 = vmatprep.subr.mxu0 0.0
    %1611 = vmatpush2.msra.mxu0 0.0
    %1612 = vmatprep.subr.mxu0 0.0
    %1613 = vmatpush2.msra.mxu0 0.0
    %1614 = vmatprep.subr.mxu0 0.0
    %1615 = vmatpush2.msra.mxu0 0.0
    %1616 = vmatprep.subr.mxu0 0.0
    %1617 = vmatpush2.msra.mxu0 0.0
    %1618 = vmatprep.subr.mxu0 0.0
    %1619 = vmatpush2.msra.mxu0 0.0
    %1620 = vmatprep.subr.mxu0 0.0
    %1621 = vmatpush2.msra.mxu0 0.0
    %1622 = vmatprep.subr.mxu0 0.0
    %1623 = vmatpush2.msra.mxu0 0.0
    %1624 = vmatprep.subr.mxu0 0.0
    %1625 = vmatpush2.msra.mxu0 0.0
    %1626 = vmatprep.mubr.f32.mxu0 0.0
    %1627 = vmatmul.mubr.f32.gmra.mxu0 %v1560
    %v1628 = vpop.f32.mrf.mxu0
    %v1629 = vadd.f32 0.0, %v1628
    %v1630 = vpop.f32.mrf.mxu0
    %1631 = vdwg.mxu0
    %1632 = vrot.lane.b32.xlu0 %v390, 32
    %v1633 = vpop.permute.xlu0 %1632
    %v1636 = vsel %vm393, %v1555, 0
    %1638 = vmatprep.subr.mxu0 0.0
    %1639 = vmatpush1.msra.mxu0 0.0
    %1640 = vmatprep.subr.mxu0 0.0
    %1641 = vmatpush1.msra.mxu0 0.0
    %1642 = vmatprep.subr.mxu0 0.0
    %1643 = vmatpush1.msra.mxu0 0.0
    %1644 = vmatprep.subr.mxu0 0.0
    %1645 = vmatpush1.msra.mxu0 0.0
    %1646 = vmatprep.subr.mxu0 0.0
    %1647 = vmatpush1.msra.mxu0 0.0
    %1648 = vmatprep.subr.mxu0 0.0
    %1649 = vmatpush1.msra.mxu0 0.0
    %1650 = vmatprep.subr.mxu0 0.0
    %1651 = vmatpush1.msra.mxu0 0.0
    %1652 = vmatprep.subr.mxu0 0.0
    %1653 = vmatpush1.msra.mxu0 0.0
    %1654 = vmatprep.subr.mxu0 0.0
    %1655 = vmatpush1.msra.mxu0 0.0
    %1656 = vmatprep.subr.mxu0 0.0
    %1657 = vmatpush1.msra.mxu0 0.0
    %1658 = vmatprep.subr.mxu0 0.0
    %1659 = vmatpush1.msra.mxu0 0.0
    %1660 = vmatprep.subr.mxu0 0.0
    %1661 = vmatpush1.msra.mxu0 0.0
    %1662 = vmatprep.subr.mxu0 0.0
    %1663 = vmatpush1.msra.mxu0 0.0
    %1664 = vmatprep.subr.mxu0 0.0
    %1665 = vmatpush1.msra.mxu0 0.0
    %1666 = vmatprep.subr.mxu0 0.0
    %1667 = vmatpush1.msra.mxu0 0.0
    %1668 = vmatprep.subr.mxu0 0.0
    %1669 = vmatpush1.msra.mxu0 %v1633
    %1670 = vmatprep.subr.mxu0 0.0
    %1671 = vmatpush2.msra.mxu0 0.0
    %1672 = vmatprep.subr.mxu0 0.0
    %1673 = vmatpush2.msra.mxu0 0.0
    %1674 = vmatprep.subr.mxu0 0.0
    %1675 = vmatpush2.msra.mxu0 0.0
    %1676 = vmatprep.subr.mxu0 0.0
    %1677 = vmatpush2.msra.mxu0 0.0
    %1678 = vmatprep.subr.mxu0 0.0
    %1679 = vmatpush2.msra.mxu0 0.0
    %1680 = vmatprep.subr.mxu0 0.0
    %1681 = vmatpush2.msra.mxu0 0.0
    %1682 = vmatprep.subr.mxu0 0.0
    %1683 = vmatpush2.msra.mxu0 0.0
    %1684 = vmatprep.subr.mxu0 0.0
    %1685 = vmatpush2.msra.mxu0 0.0
    %1686 = vmatprep.subr.mxu0 0.0
    %1687 = vmatpush2.msra.mxu0 0.0
    %1688 = vmatprep.subr.mxu0 0.0
    %1689 = vmatpush2.msra.mxu0 0.0
    %1690 = vmatprep.subr.mxu0 0.0
    %1691 = vmatpush2.msra.mxu0 0.0
    %1692 = vmatprep.subr.mxu0 0.0
    %1693 = vmatpush2.msra.mxu0 0.0
    %1694 = vmatprep.subr.mxu0 0.0
    %1695 = vmatpush2.msra.mxu0 0.0
    %1696 = vmatprep.subr.mxu0 0.0
    %1697 = vmatpush2.msra.mxu0 0.0
    %1698 = vmatprep.subr.mxu0 0.0
    %1699 = vmatpush2.msra.mxu0 0.0
    %1700 = vmatprep.subr.mxu0 0.0
    %1701 = vmatpush2.msra.mxu0 0.0
    %1702 = vmatprep.mubr.f32.mxu0 0.0
    %1703 = vmatmul.mubr.f32.gmra.mxu0 %v1636
    %v1704 = vpop.f32.mrf.mxu0
    %v1705 = vadd.f32 0.0, %v1704
    %v1706 = vpop.f32.mrf.mxu0
    %1707 = vdwg.mxu0
    %v1708 = vadd.f32 %v1376, %v1629
    %v1709 = vadd.f32 %v1377, %v1705
    %1710 = vrot.lane.b32.xlu0 %v743, 8
    %v1711 = vpop.permute.xlu0 %1710
    %1712 = vrot.lane.b32.xlu0 %v745, 8
    %v1713 = vpop.permute.xlu0 %1712
    %1716 = vrot.lane.b32.xlu0 %v1221, 16
    %v1717 = vpop.permute.xlu0 %1716
    %1718 = vrot.lane.b32.xlu0 %v1223, 16
    %v1719 = vpop.permute.xlu0 %1718
    %1722 = vrot.lane.b32.xlu0 %v1553, 24
    %v1723 = vpop.permute.xlu0 %1722
    %1724 = vrot.lane.b32.xlu0 %v1555, 24
    %v1725 = vpop.permute.xlu0 %1724
    %v1728 = vsel %vm393, %v565, %v1711
    %v1729 = vsel %vm393, %v567, %v1713
    %vm1730 = vcmask 130048
    %v1731 = vsel %vm1730, %v1728, %v1717
    %v1732 = vsel %vm1730, %v1729, %v1719
    %vm1733 = vcmask 195584
    %v1734 = vsel %vm1733, %v1731, %v1723
    %v1735 = vsel %vm1733, %v1732, %v1725
    %1736 = vst.msk [vmem:[%s10] sm:$0xff] %vm130, %v1734
    %1737 = vst.msk [vmem:[%s10 + $0x8] sm:$0xff] %vm130, %v1735
    %v1738 = vld [vmem:[%s8] sm:$0x1]
    %v1740 = vlaneseq
    %v1741 = vshrl.u32 %v1740, 7
    %v1742 = vsub.s32 0, %v1741
    %v1743 = vrot.slane %v1738, %v1742
    %v1745 = vadd.f32 %v1708, %v1743
    %v1746 = vadd.f32 %v1709, %v1743
    %1747 = vst.msk [vmem:[#allocation13] sm:$0xff] %vm130, %v1745
    %1748 = vst.msk [vmem:[#allocation13 + $0x8] sm:$0xff] %vm130, %v1746
    // Predicated region
    $region62: #{mha_forward.1} parent=1 // pred_check
      _
    $region63: #{mha_forward.1} parent=1 // pred_check_branch
      %1750 = sbr.rel (0) target = $region65
    $region64: #{mha_forward.1} parent=1 // pred_region
      %s1752 = ssub.s32 256, 256
      %1753 = vsyncadd [#allocation4], %s1752
      %s1754 = sshll.u32 [#allocation13], 4
      %s1755 = int_to_ptr.vmem [resolvable:$true] %s1754
      %1760 = dma.vmem_to_hbm [thread:$0]  %s1755, 256, %s9, [#allocation4], 128, 128, 8
    $region65: #{mha_forward.1} parent=1 // pred_fallthru
      _
    // Predicated region
    $region66: #{mha_forward.1} parent=1 // pred_check
      _
    $region67: #{mha_forward.1} parent=1 // pred_check_branch
      %1762 = sbr.rel (0) target = $region69
    $region68: #{mha_forward.1} parent=1 // pred_region
      _
    $region69: #{mha_forward.1} parent=1 // pred_fallthru
      _
    // Predicated region
    $region70: #{mha_forward.1} parent=1 // pred_check
      _
    $region71: #{mha_forward.1} parent=1 // pred_check_branch
      %1764 = sbr.rel (0) target = $region73
    $region72: #{mha_forward.1} parent=1 // pred_region
      %1765 = dma.done [#allocation4], 256
    $region73: #{mha_forward.1} parent=1 // pred_fallthru
      _
    // Predicated region
    $region74: #{mha_forward.1} parent=1 // pred_check
      _
    $region75: #{mha_forward.1} parent=1 // pred_check_branch
      %1767 = sbr.rel (0) target = $region77
    $region76: #{mha_forward.1} parent=1 // pred_region
      _
    $region77: #{mha_forward.1} parent=1 // pred_fallthru
      _
    %1768 = vsyncpa [#allocation3], 1
    %1769 = vsyncpa [#allocation6], 1
    %1770 = vsyncpa [#allocation9], 1
    %1771 = vsyncpa [#allocation12], 1
    %1772 = vsyncpa [#allocation4], 1

</llo_original>
